<compile_context>
chip_gen: v6e
topology: v6e:2x2x1
jax: 0.10.0
libtpu: 0.0.40
codegen_flags: <defaults>
</compile_context>

<pallas_src>
import functools

import jax
import jax.numpy as jnp
from jax.experimental import pallas as pl
from jax.experimental.pallas import tpu as pltpu

N_CLASSES = 3
EPS = 1e-5
B_TILE = 8          # batch elements per grid step (multiple of 8 -> aligned sublane tiles)
MAX_CHUNK_N = 512   # points per chunk step -> rows = 4096 per step


def _round_up(x, m):
    return (x + m - 1) // m * m


def stn_kernel(pts_ref, oh_ref,
               w1, b1, w2, b2, w3, b3,
               wf1a, wf1b, bf1, wf2, bf2, wf3, bf3,
               out_ref, max_acc,
               *, b_tile, chunk_n):
    """grid = (batch_tiles, point_chunks); BatchNorm already folded into W/b."""
    c = pl.program_id(1)

    @pl.when(c == 0)
    def _():
        max_acc[...] = jnp.full((b_tile, 256), -jnp.inf, jnp.float32)

    rows = b_tile * chunk_n
    x = pts_ref[...].reshape(rows, 3)                                   # (rows, 3) f32

    # conv1 (1x1, Cin=3): three VPU FMAs -- a (rows,3)@(3,128) MXU matmul would be
    # ~2% utilized.  Kept in f32 (v5e VPU has no bf16 path anyway).
    w1v = w1[...]
    h = (x[:, 0:1] * w1v[0:1, :] + x[:, 1:2] * w1v[1:2, :]
         + x[:, 2:3] * w1v[2:3, :] + b1[...])
    h = jnp.maximum(h, 0.0)                                             # (rows, 128) f32

    # conv2 / conv3 (1x1): bf16 MXU matmuls with f32 accumulation over all rows.
    h = jnp.dot(h.astype(jnp.bfloat16), w2[...],
                preferred_element_type=jnp.float32) + b2[...]
    h = jnp.maximum(h, 0.0)                                             # (rows, 128)
    h = jnp.dot(h.astype(jnp.bfloat16), w3[...],
                preferred_element_type=jnp.float32) + b3[...]           # (rows, 256)
    # ReLU after conv3 is hoisted to the finalize step: relu(max_i h) == max_i relu(h).

    # running per-batch max over point chunks (torch.max(x, 2)[0])
    chunk_max = jnp.max(h.reshape(b_tile, chunk_n, 256), axis=1)        # (b_tile, 256)
    max_acc[...] = jnp.maximum(max_acc[...], chunk_max)

    @pl.when(c == pl.num_programs(1) - 1)
    def _():
        feat = jnp.maximum(max_acc[...], 0.0).astype(jnp.bfloat16)      # hoisted conv3 ReLU
        oh = oh_ref[...].astype(jnp.bfloat16)                           # (b_tile, 3)
        # fc1 on concat([feat, one_hot]) split into two matmuls (no concat needed)
        z = (jnp.dot(feat, wf1a[...], preferred_element_type=jnp.float32)
             + jnp.dot(oh, wf1b[...], preferred_element_type=jnp.float32)
             + bf1[...])
        z = jnp.maximum(z, 0.0).astype(jnp.bfloat16)                    # (b_tile, 256)
        z = jnp.dot(z, wf2[...], preferred_element_type=jnp.float32) + bf2[...]
        z = jnp.maximum(z, 0.0).astype(jnp.bfloat16)                    # (b_tile, 128)
        out_ref[...] = (jnp.dot(z, wf3[...], preferred_element_type=jnp.float32)
                        + bf3[...])                                     # (b_tile, 3) f32


def fold_params(params):
    """Fold eval-mode BatchNorm into conv/FC weights & biases; cast MXU weights to bf16."""
    (w1, b1, g1, be1, m1, v1,
     w2, b2, g2, be2, m2, v2,
     w3, b3, g3, be3, m3, v3,
     wf1a, wf1b, bf1, gf1, bef1, mf1, vf1,
     wf2, bf2, gf2, bef2, mf2, vf2,
     wf3, bf3) = params

    def fold(w, b, g, be, m, v):
        s = g * jax.lax.rsqrt(v + EPS)               # (1, C)
        return w * s, (b - m) * s + be

    w1f, b1f = fold(w1, b1, g1, be1, m1, v1)
    w2f, b2f = fold(w2, b2, g2, be2, m2, v2)
    w3f, b3f = fold(w3, b3, g3, be3, m3, v3)
    sf1 = gf1 * jax.lax.rsqrt(vf1 + EPS)
    wf1af, wf1bf = wf1a * sf1, wf1b * sf1
    bf1f = (bf1 - mf1) * sf1 + bef1
    wf2f, bf2f = fold(wf2, bf2, gf2, bef2, mf2, vf2)

    bf16 = jnp.bfloat16
    # conv1 weight stays f32 (VPU path); biases stay f32 (added to f32 accumulators).
    return (w1f, b1f,
            w2f.astype(bf16), b2f,
            w3f.astype(bf16), b3f,
            wf1af.astype(bf16), wf1bf.astype(bf16), bf1f,
            wf2f.astype(bf16), bf2f,
            wf3.astype(bf16), bf3)


def stn_forward(pts_nchw, one_hot_vec, params, *, max_chunk_n=MAX_CHUNK_N):
    """pts_nchw: [bs, 3, num_point] (PyTorch layout), one_hot_vec: [bs, 3] -> [bs, 3]."""
    folded = fold_params(params)
    bs, _, n = pts_nchw.shape

    chunk_n = min(max_chunk_n, _round_up(n, 8))
    n_pad = _round_up(n, chunk_n)
    bs_pad = _round_up(bs, B_TILE)

    pts = jnp.transpose(pts_nchw, (0, 2, 1)).astype(jnp.float32)        # [bs, N, 3]
    # Single edge-replicating pad: point tail replication leaves the per-batch max
    # unchanged; padded batch rows are discarded after the call.
    pts = jnp.pad(pts, ((0, bs_pad - bs), (0, n_pad - n), (0, 0)), mode="edge")
    oh = jnp.pad(one_hot_vec.astype(jnp.float32), ((0, bs_pad - bs), (0, 0)))

    grid = (bs_pad // B_TILE, n_pad // chunk_n)

    in_specs = [pl.BlockSpec((B_TILE, chunk_n, 3), lambda b, c: (b, c, 0)),
                pl.BlockSpec((B_TILE, N_CLASSES), lambda b, c: (b, 0))]
    in_specs += [pl.BlockSpec(p.shape, lambda b, c: (0, 0)) for p in folded]

    kernel = functools.partial(stn_kernel, b_tile=B_TILE, chunk_n=chunk_n)

    out = pl.pallas_call(
        kernel,
        out_shape=jax.ShapeDtypeStruct((bs_pad, 3), jnp.float32),
        grid_spec=pltpu.PrefetchScalarGridSpec(
            num_scalar_prefetch=0,
            grid=grid,
            in_specs=in_specs,
            out_specs=pl.BlockSpec((B_TILE, 3), lambda b, c: (b, 0)),
            scratch_shapes=[pltpu.VMEM((B_TILE, 256), jnp.float32)]),
        compiler_params=pltpu.CompilerParams(
            dimension_semantics=("parallel", "arbitrary"),
            vmem_limit_bytes=32 * 1024 * 1024),   # v5e defaults to 16 MiB scoped VMEM
    )(pts, oh, *folded)
    return out[:bs]


def init_params(key, *, zero_fc3=True, randomize_bn=False):
    """Parameter shapes/inits mimicking the PyTorch module.

    zero_fc3=True matches init.zeros_(fc3.*) in the module; pass False to make the
    numerical check non-trivial. randomize_bn=True perturbs the (eval-mode) BN stats
    so the BN-folding path is actually exercised.
    """
    ks = jax.random.split(key, 20)

    def lin_w(k, fan_in, fan_out):
        lim = 1.0 / jnp.sqrt(jnp.float32(fan_in))
        return jax.random.uniform(k, (fan_in, fan_out), jnp.float32, -lim, lim)

    def lin_b(k, fan_in, fan_out):
        lim = 1.0 / jnp.sqrt(jnp.float32(fan_in))
        return jax.random.uniform(k, (1, fan_out), jnp.float32, -lim, lim)

    def bn_params(k, c):
        if randomize_bn:
            kg, kb, km, kv = jax.random.split(k, 4)
            return [jax.random.uniform(kg, (1, c), jnp.float32, 0.5, 1.5),
                    0.1 * jax.random.normal(kb, (1, c), jnp.float32),
                    0.1 * jax.random.normal(km, (1, c), jnp.float32),
                    jax.random.uniform(kv, (1, c), jnp.float32, 0.5, 1.5)]
        # PyTorch BatchNorm defaults: weight=1, bias=0, running_mean=0, running_var=1
        return [jnp.ones((1, c), jnp.float32), jnp.zeros((1, c), jnp.float32),
                jnp.zeros((1, c), jnp.float32), jnp.ones((1, c), jnp.float32)]

    params = []
    # conv1: Conv1d(3, 128, 1) -> weight stored transposed as (3, 128)
    params += [lin_w(ks[0], 3, 128), lin_b(ks[1], 3, 128)] + bn_params(ks[2], 128)
    # conv2: Conv1d(128, 128, 1)
    params += [lin_w(ks[3], 128, 128), lin_b(ks[4], 128, 128)] + bn_params(ks[5], 128)
    # conv3: Conv1d(128, 256, 1)
    params += [lin_w(ks[6], 128, 256), lin_b(ks[7], 128, 256)] + bn_params(ks[8], 256)
    # fc1: Linear(256 + n_classes, 256), split into feature part and one-hot part
    wf1 = lin_w(ks[9], 256 + N_CLASSES, 256)
    params += [wf1[:256, :], wf1[256:, :], lin_b(ks[10], 256 + N_CLASSES, 256)]
    params += bn_params(ks[11], 256)
    # fc2: Linear(256, 128)
    params += [lin_w(ks[12], 256, 128), lin_b(ks[13], 256, 128)] + bn_params(ks[14], 128)
    # fc3: Linear(128, 3)
    if zero_fc3:
        params += [jnp.zeros((128, 3), jnp.float32), jnp.zeros((1, 3), jnp.float32)]
    else:
        params += [lin_w(ks[15], 128, 3), lin_b(ks[16], 128, 3)]
    return params


def stn_reference(pts_nchw, one_hot_vec, params):
    """Pure-JAX f32 reference mirroring the PyTorch forward (eval-mode BN, unfolded)."""
    (w1, b1, g1, be1, m1, v1,
     w2, b2, g2, be2, m2, v2,
     w3, b3, g3, be3, m3, v3,
     wf1a, wf1b, bf1, gf1, bef1, mf1, vf1,
     wf2, bf2, gf2, bef2, mf2, vf2,
     wf3, bf3) = params

    def bn(x, g, be, m, v):
        return (x - m) * (g * jax.lax.rsqrt(v + EPS)) + be

    x = jnp.transpose(pts_nchw, (0, 2, 1))                      # [bs, N, 3]
    h = jax.nn.relu(bn(x @ w1 + b1, g1, be1, m1, v1))
    h = jax.nn.relu(bn(h @ w2 + b2, g2, be2, m2, v2))
    h = jax.nn.relu(bn(h @ w3 + b3, g3, be3, m3, v3))
    feat = jnp.max(h, axis=1)                                    # [bs, 256]
    z = feat @ wf1a + one_hot_vec @ wf1b + bf1
    z = jax.nn.relu(bn(z, gf1, bef1, mf1, vf1))
    z = jax.nn.relu(bn(z @ wf2 + bf2, gf2, bef2, mf2, vf2))
    return z @ wf3 + bf3


if __name__ == "__main__":
    key = jax.random.PRNGKey(0)
    k_pts, k_params = jax.random.split(key)

    bs, num_point = 2, 16
    pts = jax.random.normal(k_pts, (bs, 3, num_point), jnp.float32)     # PyTorch NCW layout
    one_hot = jax.nn.one_hot(jnp.array([0, 1]), N_CLASSES, dtype=jnp.float32)

    # Non-zero fc3 + randomized BN stats so every layer is exercised numerically.
    # Tolerances relaxed vs. the f32 version because matmul inputs are bf16.
    params = init_params(k_params, zero_fc3=False, randomize_bn=True)
    ref = stn_reference(pts, one_hot, params)

    out = jax.block_until_ready(stn_forward(pts, one_hot, params))
    assert out.shape == (bs, 3)
    assert jnp.allclose(out, ref, atol=2e-2, rtol=2e-2), (out, ref)

    # Exercise the multi-chunk running-max path (c > 0 accumulation) with tiny chunks.
    out_mc = jax.block_until_ready(stn_forward(pts, one_hot, params, max_chunk_n=8))
    assert jnp.allclose(out_mc, ref, atol=2e-2, rtol=2e-2), (out_mc, ref)

    # Module-faithful init (fc3 zero-initialized, default BN stats) -> exact zeros.
    params0 = init_params(k_params)
    out0 = jax.block_until_ready(stn_forward(pts, one_hot, params0))
    assert jnp.allclose(out0, stn_reference(pts, one_hot, params0), atol=1e-5, rtol=1e-5)

    print("KERNEL_OK")
</pallas_src>

<mosaic_0001>
module attributes {stable_mosaic.version = 11 : i64} {
  func.func @stn_kernel(%arg0: i32, %arg1: i32, %arg2: memref<8x16x3xf32, #tpu.memory_space<vmem>>, %arg3: memref<8x3xf32, #tpu.memory_space<vmem>>, %arg4: memref<3x128xf32, #tpu.memory_space<vmem>>, %arg5: memref<1x128xf32, #tpu.memory_space<vmem>>, %arg6: memref<128x128xbf16, #tpu.memory_space<vmem>>, %arg7: memref<1x128xf32, #tpu.memory_space<vmem>>, %arg8: memref<128x256xbf16, #tpu.memory_space<vmem>>, %arg9: memref<1x256xf32, #tpu.memory_space<vmem>>, %arg10: memref<256x256xbf16, #tpu.memory_space<vmem>>, %arg11: memref<3x256xbf16, #tpu.memory_space<vmem>>, %arg12: memref<1x256xf32, #tpu.memory_space<vmem>>, %arg13: memref<256x128xbf16, #tpu.memory_space<vmem>>, %arg14: memref<1x128xf32, #tpu.memory_space<vmem>>, %arg15: memref<128x3xbf16, #tpu.memory_space<vmem>>, %arg16: memref<1x3xf32, #tpu.memory_space<vmem>>, %arg17: memref<8x3xf32, #tpu.memory_space<vmem>>, %arg18: memref<8x256xf32, #tpu.memory_space<vmem>>) attributes {dimension_semantics = [#tpu.dimension_semantics<parallel>, #tpu.dimension_semantics<arbitrary>], iteration_bounds = array<i64: 1, 1>, scalar_prefetch = 0 : i64, scratch_operands = 1 : i64, tpu.core_type = #tpu.core_type<tc>, window_params = [{transform_indices = @transform_0, window_bounds = array<i64: 8, 16, 3>}, {transform_indices = @transform_1, window_bounds = array<i64: 8, 3>}, {pipeline_mode = #tpu.pipeline_mode<synchronous>, transform_indices = @transform_2, window_bounds = array<i64: 3, 128>}, {pipeline_mode = #tpu.pipeline_mode<synchronous>, transform_indices = @transform_3, window_bounds = array<i64: 1, 128>}, {pipeline_mode = #tpu.pipeline_mode<synchronous>, transform_indices = @transform_4, window_bounds = array<i64: 128, 128>}, {pipeline_mode = #tpu.pipeline_mode<synchronous>, transform_indices = @transform_5, window_bounds = array<i64: 1, 128>}, {pipeline_mode = #tpu.pipeline_mode<synchronous>, transform_indices = @transform_6, window_bounds = array<i64: 128, 256>}, {pipeline_mode = #tpu.pipeline_mode<synchronous>, transform_indices = @transform_7, window_bounds = array<i64: 1, 256>}, {pipeline_mode = #tpu.pipeline_mode<synchronous>, transform_indices = @transform_8, window_bounds = array<i64: 256, 256>}, {pipeline_mode = #tpu.pipeline_mode<synchronous>, transform_indices = @transform_9, window_bounds = array<i64: 3, 256>}, {pipeline_mode = #tpu.pipeline_mode<synchronous>, transform_indices = @transform_10, window_bounds = array<i64: 1, 256>}, {pipeline_mode = #tpu.pipeline_mode<synchronous>, transform_indices = @transform_11, window_bounds = array<i64: 256, 128>}, {pipeline_mode = #tpu.pipeline_mode<synchronous>, transform_indices = @transform_12, window_bounds = array<i64: 1, 128>}, {pipeline_mode = #tpu.pipeline_mode<synchronous>, transform_indices = @transform_13, window_bounds = array<i64: 128, 3>}, {pipeline_mode = #tpu.pipeline_mode<synchronous>, transform_indices = @transform_14, window_bounds = array<i64: 1, 3>}, {transform_indices = @transform_15, window_bounds = array<i64: 8, 3>}]} {
    %c0_i32 = arith.constant 0 : i32
    %0 = arith.cmpi eq, %arg1, %c0_i32 : i32
    %1 = arith.extui %0 : i1 to i32
    %c0_i32_0 = arith.constant 0 : i32
    %2 = arith.cmpi ne, %1, %c0_i32_0 : i32
    scf.if %2 {
      %cst_25 = arith.constant 0xFF800000 : f32
      %50 = vector.broadcast %cst_25 : f32 to vector<8x256xf32>
      %c0_26 = arith.constant 0 : index
      %c0_27 = arith.constant 0 : index
      %51 = vector.load %arg18[%c0_26, %c0_27] : memref<8x256xf32, #tpu.memory_space<vmem>>, vector<8x256xf32>
      tpu.vector_store %arg18[%c0_26, %c0_27], %50 {strides = array<i32>} : memref<8x256xf32, #tpu.memory_space<vmem>>, vector<8x256xf32>,
    } else {
    }
    %c0 = arith.constant 0 : index
    %c0_1 = arith.constant 0 : index
    %c0_2 = arith.constant 0 : index
    %3 = vector.load %arg2[%c0, %c0_1, %c0_2] : memref<8x16x3xf32, #tpu.memory_space<vmem>>, vector<8x16x3xf32>
    %4 = vector.shape_cast %3 : vector<8x16x3xf32> to vector<128x3xf32>
    %c0_3 = arith.constant 0 : index
    %c0_4 = arith.constant 0 : index
    %5 = vector.load %arg4[%c0_3, %c0_4] : memref<3x128xf32, #tpu.memory_space<vmem>>, vector<3x128xf32>
    %6 = vector.extract_strided_slice %4 {offsets = [0, 0], sizes = [128, 1], strides = [1, 1]} : vector<128x3xf32> to vector<128x1xf32>
    %7 = vector.extract_strided_slice %5 {offsets = [0, 0], sizes = [1, 128], strides = [1, 1]} : vector<3x128xf32> to vector<1x128xf32>
    %8 = vector.broadcast %6 : vector<128x1xf32> to vector<128x128xf32>
    %9 = vector.broadcast %7 : vector<1x128xf32> to vector<128x128xf32>
    %10 = arith.mulf %8, %9 : vector<128x128xf32>
    %11 = vector.extract_strided_slice %4 {offsets = [0, 1], sizes = [128, 1], strides = [1, 1]} : vector<128x3xf32> to vector<128x1xf32>
    %12 = vector.extract_strided_slice %5 {offsets = [1, 0], sizes = [1, 128], strides = [1, 1]} : vector<3x128xf32> to vector<1x128xf32>
    %13 = vector.broadcast %11 : vector<128x1xf32> to vector<128x128xf32>
    %14 = vector.broadcast %12 : vector<1x128xf32> to vector<128x128xf32>
    %15 = arith.mulf %13, %14 : vector<128x128xf32>
    %16 = arith.addf %10, %15 : vector<128x128xf32>
    %17 = vector.extract_strided_slice %4 {offsets = [0, 2], sizes = [128, 1], strides = [1, 1]} : vector<128x3xf32> to vector<128x1xf32>
    %18 = vector.extract_strided_slice %5 {offsets = [2, 0], sizes = [1, 128], strides = [1, 1]} : vector<3x128xf32> to vector<1x128xf32>
    %19 = vector.broadcast %17 : vector<128x1xf32> to vector<128x128xf32>
    %20 = vector.broadcast %18 : vector<1x128xf32> to vector<128x128xf32>
    %21 = arith.mulf %19, %20 : vector<128x128xf32>
    %22 = arith.addf %16, %21 : vector<128x128xf32>
    %c0_5 = arith.constant 0 : index
    %c0_6 = arith.constant 0 : index
    %23 = vector.load %arg5[%c0_5, %c0_6] : memref<1x128xf32, #tpu.memory_space<vmem>>, vector<1x128xf32>
    %24 = vector.broadcast %23 : vector<1x128xf32> to vector<128x128xf32>
    %25 = arith.addf %22, %24 : vector<128x128xf32>
    %cst = arith.constant 0.000000e+00 : f32
    %26 = vector.broadcast %cst : f32 to vector<128x128xf32>
    %27 = arith.maximumf %25, %26 : vector<128x128xf32>
    %28 = arith.truncf %27 : vector<128x128xf32> to vector<128x128xbf16>
    %c0_7 = arith.constant 0 : index
    %c0_8 = arith.constant 0 : index
    %29 = vector.load %arg6[%c0_7, %c0_8] : memref<128x128xbf16, #tpu.memory_space<vmem>>, vector<128x128xbf16>
    %cst_9 = arith.constant dense<0.000000e+00> : vector<128x128xf32>
    %30 = tpu.matmul %28, %29, %cst_9 {dimension_numbers = #tpu.dot_dimension_numbers<[1], [0], [0], [1], [0, 0, 1, 1], [], []>} : vector<128x128xbf16>, vector<128x128xbf16>, vector<128x128xf32> -> vector<128x128xf32>
    %c0_10 = arith.constant 0 : index
    %c0_11 = arith.constant 0 : index
    %31 = vector.load %arg7[%c0_10, %c0_11] : memref<1x128xf32, #tpu.memory_space<vmem>>, vector<1x128xf32>
    %32 = vector.broadcast %31 : vector<1x128xf32> to vector<128x128xf32>
    %33 = arith.addf %30, %32 : vector<128x128xf32>
    %cst_12 = arith.constant 0.000000e+00 : f32
    %34 = vector.broadcast %cst_12 : f32 to vector<128x128xf32>
    %35 = arith.maximumf %33, %34 : vector<128x128xf32>
    %36 = arith.truncf %35 : vector<128x128xf32> to vector<128x128xbf16>
    %c0_13 = arith.constant 0 : index
    %c0_14 = arith.constant 0 : index
    %37 = vector.load %arg8[%c0_13, %c0_14] : memref<128x256xbf16, #tpu.memory_space<vmem>>, vector<128x256xbf16>
    %cst_15 = arith.constant dense<0.000000e+00> : vector<128x256xf32>
    %38 = tpu.matmul %36, %37, %cst_15 {dimension_numbers = #tpu.dot_dimension_numbers<[1], [0], [0], [1], [0, 0, 1, 1], [], []>} : vector<128x128xbf16>, vector<128x256xbf16>, vector<128x256xf32> -> vector<128x256xf32>
    %c0_16 = arith.constant 0 : index
    %c0_17 = arith.constant 0 : index
    %39 = vector.load %arg9[%c0_16, %c0_17] : memref<1x256xf32, #tpu.memory_space<vmem>>, vector<1x256xf32>
    %40 = vector.broadcast %39 : vector<1x256xf32> to vector<128x256xf32>
    %41 = arith.addf %38, %40 : vector<128x256xf32>
    %42 = vector.shape_cast %41 : vector<128x256xf32> to vector<8x16x256xf32>
    %cst_18 = arith.constant dense<0xFF800000> : vector<8x256xf32>
    %43 = vector.multi_reduction <maximumf>, %42, %cst_18 [1] : vector<8x16x256xf32> to vector<8x256xf32>
    %c0_19 = arith.constant 0 : index
    %c0_20 = arith.constant 0 : index
    %44 = vector.load %arg18[%c0_19, %c0_20] : memref<8x256xf32, #tpu.memory_space<vmem>>, vector<8x256xf32>
    %45 = arith.maximumf %44, %43 : vector<8x256xf32>
    %c0_21 = arith.constant 0 : index
    %c0_22 = arith.constant 0 : index
    %46 = vector.load %arg18[%c0_21, %c0_22] : memref<8x256xf32, #tpu.memory_space<vmem>>, vector<8x256xf32>
    tpu.vector_store %arg18[%c0_21, %c0_22], %45 {strides = array<i32>} : memref<8x256xf32, #tpu.memory_space<vmem>>, vector<8x256xf32>,
    %c0_i32_23 = arith.constant 0 : i32
    %47 = arith.cmpi eq, %arg1, %c0_i32_23 : i32
    %48 = arith.extui %47 : i1 to i32
    %c0_i32_24 = arith.constant 0 : i32
    %49 = arith.cmpi ne, %48, %c0_i32_24 : i32
    scf.if %49 {
      %c0_25 = arith.constant 0 : index
      %c0_26 = arith.constant 0 : index
      %50 = vector.load %arg18[%c0_25, %c0_26] : memref<8x256xf32, #tpu.memory_space<vmem>>, vector<8x256xf32>
      %cst_27 = arith.constant 0.000000e+00 : f32
      %51 = vector.broadcast %cst_27 : f32 to vector<8x256xf32>
      %52 = arith.maximumf %50, %51 : vector<8x256xf32>
      %53 = arith.truncf %52 : vector<8x256xf32> to vector<8x256xbf16>
      %c0_28 = arith.constant 0 : index
      %c0_29 = arith.constant 0 : index
      %54 = vector.load %arg3[%c0_28, %c0_29] : memref<8x3xf32, #tpu.memory_space<vmem>>, vector<8x3xf32>
      %55 = arith.truncf %54 : vector<8x3xf32> to vector<8x3xbf16>
      %c0_30 = arith.constant 0 : index
      %c0_31 = arith.constant 0 : index
      %56 = vector.load %arg10[%c0_30, %c0_31] : memref<256x256xbf16, #tpu.memory_space<vmem>>, vector<256x256xbf16>
      %cst_32 = arith.constant dense<0.000000e+00> : vector<8x256xf32>
      %57 = tpu.matmul %53, %56, %cst_32 {dimension_numbers = #tpu.dot_dimension_numbers<[1], [0], [0], [1], [0, 0, 1, 1], [], []>} : vector<8x256xbf16>, vector<256x256xbf16>, vector<8x256xf32> -> vector<8x256xf32>
      %c0_33 = arith.constant 0 : index
      %c0_34 = arith.constant 0 : index
      %58 = vector.load %arg11[%c0_33, %c0_34] : memref<3x256xbf16, #tpu.memory_space<vmem>>, vector<3x256xbf16>
      %cst_35 = arith.constant dense<0.000000e+00> : vector<8x256xf32>
      %59 = tpu.matmul %55, %58, %cst_35 {dimension_numbers = #tpu.dot_dimension_numbers<[1], [0], [0], [1], [0, 0, 1, 1], [], []>} : vector<8x3xbf16>, vector<3x256xbf16>, vector<8x256xf32> -> vector<8x256xf32>
      %60 = arith.addf %57, %59 : vector<8x256xf32>
      %c0_36 = arith.constant 0 : index
      %c0_37 = arith.constant 0 : index
      %61 = vector.load %arg12[%c0_36, %c0_37] : memref<1x256xf32, #tpu.memory_space<vmem>>, vector<1x256xf32>
      %62 = vector.broadcast %61 : vector<1x256xf32> to vector<8x256xf32>
      %63 = arith.addf %60, %62 : vector<8x256xf32>
      %cst_38 = arith.constant 0.000000e+00 : f32
      %64 = vector.broadcast %cst_38 : f32 to vector<8x256xf32>
      %65 = arith.maximumf %63, %64 : vector<8x256xf32>
      %66 = arith.truncf %65 : vector<8x256xf32> to vector<8x256xbf16>
      %c0_39 = arith.constant 0 : index
      %c0_40 = arith.constant 0 : index
      %67 = vector.load %arg13[%c0_39, %c0_40] : memref<256x128xbf16, #tpu.memory_space<vmem>>, vector<256x128xbf16>
      %cst_41 = arith.constant dense<0.000000e+00> : vector<8x128xf32>
      %68 = tpu.matmul %66, %67, %cst_41 {dimension_numbers = #tpu.dot_dimension_numbers<[1], [0], [0], [1], [0, 0, 1, 1], [], []>} : vector<8x256xbf16>, vector<256x128xbf16>, vector<8x128xf32> -> vector<8x128xf32>
      %c0_42 = arith.constant 0 : index
      %c0_43 = arith.constant 0 : index
      %69 = vector.load %arg14[%c0_42, %c0_43] : memref<1x128xf32, #tpu.memory_space<vmem>>, vector<1x128xf32>
      %70 = vector.broadcast %69 : vector<1x128xf32> to vector<8x128xf32>
      %71 = arith.addf %68, %70 : vector<8x128xf32>
      %cst_44 = arith.constant 0.000000e+00 : f32
      %72 = vector.broadcast %cst_44 : f32 to vector<8x128xf32>
      %73 = arith.maximumf %71, %72 : vector<8x128xf32>
      %74 = arith.truncf %73 : vector<8x128xf32> to vector<8x128xbf16>
      %c0_45 = arith.constant 0 : index
      %c0_46 = arith.constant 0 : index
      %75 = vector.load %arg15[%c0_45, %c0_46] : memref<128x3xbf16, #tpu.memory_space<vmem>>, vector<128x3xbf16>
      %cst_47 = arith.constant dense<0.000000e+00> : vector<8x3xf32>
      %76 = tpu.matmul %74, %75, %cst_47 {dimension_numbers = #tpu.dot_dimension_numbers<[1], [0], [0], [1], [0, 0, 1, 1], [], []>} : vector<8x128xbf16>, vector<128x3xbf16>, vector<8x3xf32> -> vector<8x3xf32>
      %c0_48 = arith.constant 0 : index
      %c0_49 = arith.constant 0 : index
      %77 = vector.load %arg16[%c0_48, %c0_49] : memref<1x3xf32, #tpu.memory_space<vmem>>, vector<1x3xf32>
      %78 = vector.broadcast %77 : vector<1x3xf32> to vector<8x3xf32>
      %79 = arith.addf %76, %78 : vector<8x3xf32>
      %c0_50 = arith.constant 0 : index
      %c0_51 = arith.constant 0 : index
      %80 = vector.load %arg17[%c0_50, %c0_51] : memref<8x3xf32, #tpu.memory_space<vmem>>, vector<8x3xf32>
      tpu.vector_store %arg17[%c0_50, %c0_51], %79 {strides = array<i32>} : memref<8x3xf32, #tpu.memory_space<vmem>>, vector<8x3xf32>,
    } else {
    }
    return
  }
  func.func @transform_0(%arg0: i32, %arg1: i32) -> (i32, i32, i32) {
    %c0_i32 = arith.constant 0 : i32
    %c0_i32_0 = arith.constant 0 : i32
    return %arg0, %arg1, %c0_i32 : i32, i32, i32
  }
  func.func @transform_1(%arg0: i32, %arg1: i32) -> (i32, i32) {
    %c0_i32 = arith.constant 0 : i32
    %c0_i32_0 = arith.constant 0 : i32
    return %arg0, %c0_i32 : i32, i32
  }
  func.func @transform_2(%arg0: i32, %arg1: i32) -> (i32, i32) {
    %c0_i32 = arith.constant 0 : i32
    %c0_i32_0 = arith.constant 0 : i32
    %c0_i32_1 = arith.constant 0 : i32
    return %c0_i32, %c0_i32_0 : i32, i32
  }
  func.func @transform_3(%arg0: i32, %arg1: i32) -> (i32, i32) {
    %c0_i32 = arith.constant 0 : i32
    %c0_i32_0 = arith.constant 0 : i32
    %c0_i32_1 = arith.constant 0 : i32
    return %c0_i32, %c0_i32_0 : i32, i32
  }
  func.func @transform_4(%arg0: i32, %arg1: i32) -> (i32, i32) {
    %c0_i32 = arith.constant 0 : i32
    %c0_i32_0 = arith.constant 0 : i32
    %c0_i32_1 = arith.constant 0 : i32
    return %c0_i32, %c0_i32_0 : i32, i32
  }
  func.func @transform_5(%arg0: i32, %arg1: i32) -> (i32, i32) {
    %c0_i32 = arith.constant 0 : i32
    %c0_i32_0 = arith.constant 0 : i32
    %c0_i32_1 = arith.constant 0 : i32
    return %c0_i32, %c0_i32_0 : i32, i32
  }
  func.func @transform_6(%arg0: i32, %arg1: i32) -> (i32, i32) {
    %c0_i32 = arith.constant 0 : i32
    %c0_i32_0 = arith.constant 0 : i32
    %c0_i32_1 = arith.constant 0 : i32
    return %c0_i32, %c0_i32_0 : i32, i32
  }
  func.func @transform_7(%arg0: i32, %arg1: i32) -> (i32, i32) {
    %c0_i32 = arith.constant 0 : i32
    %c0_i32_0 = arith.constant 0 : i32
    %c0_i32_1 = arith.constant 0 : i32
    return %c0_i32, %c0_i32_0 : i32, i32
  }
  func.func @transform_8(%arg0: i32, %arg1: i32) -> (i32, i32) {
    %c0_i32 = arith.constant 0 : i32
    %c0_i32_0 = arith.constant 0 : i32
    %c0_i32_1 = arith.constant 0 : i32
    return %c0_i32, %c0_i32_0 : i32, i32
  }
  func.func @transform_9(%arg0: i32, %arg1: i32) -> (i32, i32) {
    %c0_i32 = arith.constant 0 : i32
    %c0_i32_0 = arith.constant 0 : i32
    %c0_i32_1 = arith.constant 0 : i32
    return %c0_i32, %c0_i32_0 : i32, i32
  }
  func.func @transform_10(%arg0: i32, %arg1: i32) -> (i32, i32) {
    %c0_i32 = arith.constant 0 : i32
    %c0_i32_0 = arith.constant 0 : i32
    %c0_i32_1 = arith.constant 0 : i32
    return %c0_i32, %c0_i32_0 : i32, i32
  }
  func.func @transform_11(%arg0: i32, %arg1: i32) -> (i32, i32) {
    %c0_i32 = arith.constant 0 : i32
    %c0_i32_0 = arith.constant 0 : i32
    %c0_i32_1 = arith.constant 0 : i32
    return %c0_i32, %c0_i32_0 : i32, i32
  }
  func.func @transform_12(%arg0: i32, %arg1: i32) -> (i32, i32) {
    %c0_i32 = arith.constant 0 : i32
    %c0_i32_0 = arith.constant 0 : i32
    %c0_i32_1 = arith.constant 0 : i32
    return %c0_i32, %c0_i32_0 : i32, i32
  }
  func.func @transform_13(%arg0: i32, %arg1: i32) -> (i32, i32) {
    %c0_i32 = arith.constant 0 : i32
    %c0_i32_0 = arith.constant 0 : i32
    %c0_i32_1 = arith.constant 0 : i32
    return %c0_i32, %c0_i32_0 : i32, i32
  }
  func.func @transform_14(%arg0: i32, %arg1: i32) -> (i32, i32) {
    %c0_i32 = arith.constant 0 : i32
    %c0_i32_0 = arith.constant 0 : i32
    %c0_i32_1 = arith.constant 0 : i32
    return %c0_i32, %c0_i32_0 : i32, i32
  }
  func.func @transform_15(%arg0: i32, %arg1: i32) -> (i32, i32) {
    %c0_i32 = arith.constant 0 : i32
    %c0_i32_0 = arith.constant 0 : i32
    return %arg0, %c0_i32 : i32, i32
  }
}

</mosaic_0001>

<llo_original>
// kernel: tpu_custom_call.1
$region0: #{tpu_custom_call.1}
  #allocation0 [shape = 'u32[]', space=smem, size = 0x4, offset = 0x4, fixed_abs, tag = 'smem constant byte address 0x4 - core index']
  #allocation1 [shape = 'u32[144,128]{1,0:T(1,128)}', space=vmem, size = 0x12000, scoped, tag = 'internal scratch']
  #allocation2 [shape = 'f32[8,256]{1,0:T(8,128)}', space=vmem, size = 0x2000, scoped, tag = 'scratch operand']
  %s0 = inlined_call_operand.vmem [shape: f32[8,16,3], index: 0, kind: input, shape index: {}]
  %s1 = inlined_call_operand.vmem [shape: f32[8,3], index: 1, kind: input, shape index: {}]
  %s2 = inlined_call_operand.vmem [shape: f32[3,128], index: 2, kind: input, shape index: {}]
  %s3 = inlined_call_operand.vmem [shape: f32[1,128], index: 3, kind: input, shape index: {}]
  %s4 = inlined_call_operand.vmem [shape: bf16[128,128], index: 4, kind: input, shape index: {}]
  %s5 = inlined_call_operand.vmem [shape: f32[1,128], index: 5, kind: input, shape index: {}]
  %s6 = inlined_call_operand.vmem [shape: bf16[128,256], index: 6, kind: input, shape index: {}]
  %s7 = inlined_call_operand.vmem [shape: f32[1,256], index: 7, kind: input, shape index: {}]
  %s8 = inlined_call_operand.hbm [shape: bf16[256,256], index: 8, kind: input, shape index: {}]
  %s9 = inlined_call_operand.vmem [shape: bf16[3,256], index: 9, kind: input, shape index: {}]
  %s10 = inlined_call_operand.vmem [shape: f32[1,256], index: 10, kind: input, shape index: {}]
  %s11 = inlined_call_operand.hbm [shape: bf16[256,128], index: 11, kind: input, shape index: {}]
  %s12 = inlined_call_operand.vmem [shape: f32[1,128], index: 12, kind: input, shape index: {}]
  %s13 = inlined_call_operand.vmem [shape: bf16[128,3], index: 13, kind: input, shape index: {}]
  %s14 = inlined_call_operand.vmem [shape: f32[1,3], index: 14, kind: input, shape index: {}]
  %s15 = inlined_call_operand.vmem [shape: f32[8,3], index: 15, kind: output, shape index: {}]
  %s16 = sld [smem:[#allocation0]]
  $region86: #{tpu_custom_call.1} parent=0
    _
  %s18 = ssub.s32 1, %s16
  %s19 = scalar_select 0, %s18, %s16
  $region1: #{tpu_custom_call.1} parent=0
    #allocation3 [shape = 'u8[131072]{0}', space=vmem, size = 0x20000, scoped, tag = 'input window, operand 8, single buffered']
    #allocation4 [shape = 's32[1]{0}', space=sflag, size = 0x4, scoped, tag = 'scoped memory for tpu_custom_call.1']
    #allocation5 [shape = 'u8[65536]{0}', space=vmem, size = 0x10000, scoped, tag = 'input window, operand 11, single buffered']
    #allocation6 [shape = 's32[1]{0}', space=sflag, size = 0x4, scoped, tag = 'scoped memory for tpu_custom_call.1']
    %20 = vsyncpa [#allocation4], 0
    %21 = vsyncpa [#allocation6], 0
    // Predicated region
    $region2: #{tpu_custom_call.1} parent=1 // pred_check
      _
    $region3: #{tpu_custom_call.1} parent=1 // pred_check_branch
      %23 = sbr.rel (0) target = $region5
    $region4: #{tpu_custom_call.1} parent=1 // pred_region
      _
    $region5: #{tpu_custom_call.1} parent=1 // pred_fallthru
      _
    // Predicated region
    $region6: #{tpu_custom_call.1} parent=1 // pred_check
      _
    $region7: #{tpu_custom_call.1} parent=1 // pred_check_branch
      %25 = sbr.rel (0) target = $region9
    $region8: #{tpu_custom_call.1} parent=1 // pred_region
      _
    $region9: #{tpu_custom_call.1} parent=1 // pred_fallthru
      _
    // Predicated region
    $region10: #{tpu_custom_call.1} parent=1 // pred_check
      _
    $region11: #{tpu_custom_call.1} parent=1 // pred_check_branch
      %27 = sbr.rel (0) target = $region13
    $region12: #{tpu_custom_call.1} parent=1 // pred_region
      _
    $region13: #{tpu_custom_call.1} parent=1 // pred_fallthru
      _
    // Predicated region
    $region14: #{tpu_custom_call.1} parent=1 // pred_check
      _
    $region15: #{tpu_custom_call.1} parent=1 // pred_check_branch
      %29 = sbr.rel (0) target = $region17
    $region16: #{tpu_custom_call.1} parent=1 // pred_region
      _
    $region17: #{tpu_custom_call.1} parent=1 // pred_fallthru
      _
    // Predicated region
    $region18: #{tpu_custom_call.1} parent=1 // pred_check
      _
    $region19: #{tpu_custom_call.1} parent=1 // pred_check_branch
      %31 = sbr.rel (0) target = $region21
    $region20: #{tpu_custom_call.1} parent=1 // pred_region
      _
    $region21: #{tpu_custom_call.1} parent=1 // pred_fallthru
      _
    // Predicated region
    $region22: #{tpu_custom_call.1} parent=1 // pred_check
      _
    $region23: #{tpu_custom_call.1} parent=1 // pred_check_branch
      %33 = sbr.rel (0) target = $region25
    $region24: #{tpu_custom_call.1} parent=1 // pred_region
      _
    $region25: #{tpu_custom_call.1} parent=1 // pred_fallthru
      _
    // Predicated region
    $region26: #{tpu_custom_call.1} parent=1 // pred_check
      _
    $region27: #{tpu_custom_call.1} parent=1 // pred_check_branch
      %35 = sbr.rel (0) target = $region29
    $region28: #{tpu_custom_call.1} parent=1 // pred_region
      _
    $region29: #{tpu_custom_call.1} parent=1 // pred_fallthru
      _
    // Predicated region
    $region30: #{tpu_custom_call.1} parent=1 // pred_check
      _
    $region31: #{tpu_custom_call.1} parent=1 // pred_check_branch
      %37 = sbr.rel (0) target = $region33
    $region32: #{tpu_custom_call.1} parent=1 // pred_region
      _
    $region33: #{tpu_custom_call.1} parent=1 // pred_fallthru
      _
    // Predicated region
    $region34: #{tpu_custom_call.1} parent=1 // pred_check
      _
    $region35: #{tpu_custom_call.1} parent=1 // pred_check_branch
      %39 = sbr.rel (0) target = $region37
    $region36: #{tpu_custom_call.1} parent=1 // pred_region
      %s41 = ssub.s32 4096, 4096
      %42 = vsyncadd [#allocation4], %s41
      %s43 = sshll.u32 [#allocation3], 4
      %s44 = int_to_ptr.vmem [resolvable:$true] %s43
      %49 = dma.hbm_to_vmem [thread:$0]  %s8, 4096, %s44, [#allocation4], 128, 128, 8
    $region37: #{tpu_custom_call.1} parent=1 // pred_fallthru
      _
    // Predicated region
    $region38: #{tpu_custom_call.1} parent=1 // pred_check
      _
    $region39: #{tpu_custom_call.1} parent=1 // pred_check_branch
      %51 = sbr.rel (0) target = $region41
    $region40: #{tpu_custom_call.1} parent=1 // pred_region
      _
    $region41: #{tpu_custom_call.1} parent=1 // pred_fallthru
      _
    // Predicated region
    $region42: #{tpu_custom_call.1} parent=1 // pred_check
      _
    $region43: #{tpu_custom_call.1} parent=1 // pred_check_branch
      %53 = sbr.rel (0) target = $region45
    $region44: #{tpu_custom_call.1} parent=1 // pred_region
      _
    $region45: #{tpu_custom_call.1} parent=1 // pred_fallthru
      _
    // Predicated region
    $region46: #{tpu_custom_call.1} parent=1 // pred_check
      _
    $region47: #{tpu_custom_call.1} parent=1 // pred_check_branch
      %55 = sbr.rel (0) target = $region49
    $region48: #{tpu_custom_call.1} parent=1 // pred_region
      %s57 = ssub.s32 2048, 2048
      %58 = vsyncadd [#allocation6], %s57
      %s59 = sshll.u32 [#allocation5], 4
      %s60 = int_to_ptr.vmem [resolvable:$true] %s59
      %65 = dma.hbm_to_vmem [thread:$0]  %s11, 2048, %s60, [#allocation6], 64, 64, 4
    $region49: #{tpu_custom_call.1} parent=1 // pred_fallthru
      _
    // Predicated region
    $region50: #{tpu_custom_call.1} parent=1 // pred_check
      _
    $region51: #{tpu_custom_call.1} parent=1 // pred_check_branch
      %67 = sbr.rel (0) target = $region53
    $region52: #{tpu_custom_call.1} parent=1 // pred_region
      _
    $region53: #{tpu_custom_call.1} parent=1 // pred_fallthru
      _
    // Predicated region
    $region54: #{tpu_custom_call.1} parent=1 // pred_check
      _
    $region55: #{tpu_custom_call.1} parent=1 // pred_check_branch
      %69 = sbr.rel (0) target = $region57
    $region56: #{tpu_custom_call.1} parent=1 // pred_region
      _
    $region57: #{tpu_custom_call.1} parent=1 // pred_fallthru
      _
    // Predicated region
    $region58: #{tpu_custom_call.1} parent=1 // pred_check
      _
    $region59: #{tpu_custom_call.1} parent=1 // pred_check_branch
      %71 = sbr.rel (0) target = $region61
    $region60: #{tpu_custom_call.1} parent=1 // pred_region
      _
    $region61: #{tpu_custom_call.1} parent=1 // pred_fallthru
      _
    // Predicated region
    $region62: #{tpu_custom_call.1} parent=1 // pred_check
      _
    $region63: #{tpu_custom_call.1} parent=1 // pred_check_branch
      %73 = sbr.rel (0) target = $region65
    $region64: #{tpu_custom_call.1} parent=1 // pred_region
      %74 = dma.done [#allocation4], 4096
    $region65: #{tpu_custom_call.1} parent=1 // pred_fallthru
      _
    // Predicated region
    $region66: #{tpu_custom_call.1} parent=1 // pred_check
      _
    $region67: #{tpu_custom_call.1} parent=1 // pred_check_branch
      %76 = sbr.rel (0) target = $region69
    $region68: #{tpu_custom_call.1} parent=1 // pred_region
      %77 = dma.done [#allocation6], 2048
    $region69: #{tpu_custom_call.1} parent=1 // pred_fallthru
      _
    %p79 = scmp.eq.s32.totalorder 0, 0
    // Predicated region
    $region70: #{tpu_custom_call.1} parent=1 // pred_check
      %p80 = pneg %p79
    $region71: #{tpu_custom_call.1} parent=1 // pred_check_branch
      %82 = sbr.rel (%p80) target = $region73
    $region72: #{tpu_custom_call.1} parent=1 // pred_region
      %83 = vst [vmem:[#allocation2] sm:$0xff] -inf
      %84 = vst [vmem:[#allocation2 + $0x8] sm:$0xff] -inf
    $region73: #{tpu_custom_call.1} parent=1 // pred_fallthru
      _
    %v85 = vld [vmem:[%s0] sm:$0xff]
    %v86 = vld [vmem:[%s0 + $0x8] sm:$0xff]
    %v87 = vld [vmem:[%s0 + $0x10] sm:$0xff]
    %v88 = vld [vmem:[%s0 + $0x18] sm:$0xff]
    %v89 = vld [vmem:[%s0 + $0x20] sm:$0xff]
    %v90 = vld [vmem:[%s0 + $0x28] sm:$0xff]
    %v91 = vld [vmem:[%s0 + $0x30] sm:$0xff]
    %v92 = vld [vmem:[%s0 + $0x38] sm:$0xff]
    %v93 = vld [vmem:[%s0 + $0x40] sm:$0xff]
    %v94 = vld [vmem:[%s0 + $0x48] sm:$0xff]
    %v95 = vld [vmem:[%s0 + $0x50] sm:$0xff]
    %v96 = vld [vmem:[%s0 + $0x58] sm:$0xff]
    %v97 = vld [vmem:[%s0 + $0x60] sm:$0xff]
    %v98 = vld [vmem:[%s0 + $0x68] sm:$0xff]
    %v99 = vld [vmem:[%s0 + $0x70] sm:$0xff]
    %v100 = vld [vmem:[%s0 + $0x78] sm:$0xff]
    %v101 = vld [vmem:[%s2] sm:$0x7]
    %103 = vset.pattern.permute.xlu0 0
    %104 = vperm.xlu0 %103, %v85
    %v105 = vpop.permute.xlu0 %104
    %108 = vset.pattern.permute.xlu0 0
    %109 = vperm.xlu0 %108, %v86
    %v110 = vpop.permute.xlu0 %109
    %113 = vset.pattern.permute.xlu0 0
    %114 = vperm.xlu0 %113, %v87
    %v115 = vpop.permute.xlu0 %114
    %118 = vset.pattern.permute.xlu0 0
    %119 = vperm.xlu0 %118, %v88
    %v120 = vpop.permute.xlu0 %119
    %123 = vset.pattern.permute.xlu0 0
    %124 = vperm.xlu0 %123, %v89
    %v125 = vpop.permute.xlu0 %124
    %128 = vset.pattern.permute.xlu0 0
    %129 = vperm.xlu0 %128, %v90
    %v130 = vpop.permute.xlu0 %129
    %133 = vset.pattern.permute.xlu0 0
    %134 = vperm.xlu0 %133, %v91
    %v135 = vpop.permute.xlu0 %134
    %138 = vset.pattern.permute.xlu0 0
    %139 = vperm.xlu0 %138, %v92
    %v140 = vpop.permute.xlu0 %139
    %143 = vset.pattern.permute.xlu0 0
    %144 = vperm.xlu0 %143, %v93
    %v145 = vpop.permute.xlu0 %144
    %148 = vset.pattern.permute.xlu0 0
    %149 = vperm.xlu0 %148, %v94
    %v150 = vpop.permute.xlu0 %149
    %153 = vset.pattern.permute.xlu0 0
    %154 = vperm.xlu0 %153, %v95
    %v155 = vpop.permute.xlu0 %154
    %158 = vset.pattern.permute.xlu0 0
    %159 = vperm.xlu0 %158, %v96
    %v160 = vpop.permute.xlu0 %159
    %163 = vset.pattern.permute.xlu0 0
    %164 = vperm.xlu0 %163, %v97
    %v165 = vpop.permute.xlu0 %164
    %168 = vset.pattern.permute.xlu0 0
    %169 = vperm.xlu0 %168, %v98
    %v170 = vpop.permute.xlu0 %169
    %173 = vset.pattern.permute.xlu0 0
    %174 = vperm.xlu0 %173, %v99
    %v175 = vpop.permute.xlu0 %174
    %178 = vset.pattern.permute.xlu0 0
    %179 = vperm.xlu0 %178, %v100
    %v180 = vpop.permute.xlu0 %179
    %v182 = vlaneseq
    %v183 = vshrl.u32 %v182, 7
    %v184 = vsub.s32 0, %v183
    %v185 = vrot.slane %v101, %v184
    %v186 = vmul.f32 %v105, %v185
    %v187 = vmul.f32 %v110, %v185
    %v188 = vmul.f32 %v115, %v185
    %v189 = vmul.f32 %v120, %v185
    %v190 = vmul.f32 %v125, %v185
    %v191 = vmul.f32 %v130, %v185
    %v192 = vmul.f32 %v135, %v185
    %v193 = vmul.f32 %v140, %v185
    %v194 = vmul.f32 %v145, %v185
    %v195 = vmul.f32 %v150, %v185
    %v196 = vmul.f32 %v155, %v185
    %v197 = vmul.f32 %v160, %v185
    %v198 = vmul.f32 %v165, %v185
    %v199 = vmul.f32 %v170, %v185
    %v200 = vmul.f32 %v175, %v185
    %v201 = vmul.f32 %v180, %v185
    %202 = vset.pattern.permute.xlu0 1
    %203 = vperm.xlu0 %202, %v85
    %v204 = vpop.permute.xlu0 %203
    %206 = vset.pattern.permute.xlu0 1
    %207 = vperm.xlu0 %206, %v86
    %v208 = vpop.permute.xlu0 %207
    %210 = vset.pattern.permute.xlu0 1
    %211 = vperm.xlu0 %210, %v87
    %v212 = vpop.permute.xlu0 %211
    %214 = vset.pattern.permute.xlu0 1
    %215 = vperm.xlu0 %214, %v88
    %v216 = vpop.permute.xlu0 %215
    %218 = vset.pattern.permute.xlu0 1
    %219 = vperm.xlu0 %218, %v89
    %v220 = vpop.permute.xlu0 %219
    %222 = vset.pattern.permute.xlu0 1
    %223 = vperm.xlu0 %222, %v90
    %v224 = vpop.permute.xlu0 %223
    %226 = vset.pattern.permute.xlu0 1
    %227 = vperm.xlu0 %226, %v91
    %v228 = vpop.permute.xlu0 %227
    %230 = vset.pattern.permute.xlu0 1
    %231 = vperm.xlu0 %230, %v92
    %v232 = vpop.permute.xlu0 %231
    %234 = vset.pattern.permute.xlu0 1
    %235 = vperm.xlu0 %234, %v93
    %v236 = vpop.permute.xlu0 %235
    %238 = vset.pattern.permute.xlu0 1
    %239 = vperm.xlu0 %238, %v94
    %v240 = vpop.permute.xlu0 %239
    %242 = vset.pattern.permute.xlu0 1
    %243 = vperm.xlu0 %242, %v95
    %v244 = vpop.permute.xlu0 %243
    %246 = vset.pattern.permute.xlu0 1
    %247 = vperm.xlu0 %246, %v96
    %v248 = vpop.permute.xlu0 %247
    %250 = vset.pattern.permute.xlu0 1
    %251 = vperm.xlu0 %250, %v97
    %v252 = vpop.permute.xlu0 %251
    %254 = vset.pattern.permute.xlu0 1
    %255 = vperm.xlu0 %254, %v98
    %v256 = vpop.permute.xlu0 %255
    %258 = vset.pattern.permute.xlu0 1
    %259 = vperm.xlu0 %258, %v99
    %v260 = vpop.permute.xlu0 %259
    %262 = vset.pattern.permute.xlu0 1
    %263 = vperm.xlu0 %262, %v100
    %v264 = vpop.permute.xlu0 %263
    %v266 = vlaneseq
    %v267 = vshrl.u32 %v266, 7
    %v268 = vsub.s32 1, %v267
    %v269 = vrot.slane %v101, %v268
    %v270 = vmul.f32 %v204, %v269
    %v271 = vmul.f32 %v208, %v269
    %v272 = vmul.f32 %v212, %v269
    %v273 = vmul.f32 %v216, %v269
    %v274 = vmul.f32 %v220, %v269
    %v275 = vmul.f32 %v224, %v269
    %v276 = vmul.f32 %v228, %v269
    %v277 = vmul.f32 %v232, %v269
    %v278 = vmul.f32 %v236, %v269
    %v279 = vmul.f32 %v240, %v269
    %v280 = vmul.f32 %v244, %v269
    %v281 = vmul.f32 %v248, %v269
    %v282 = vmul.f32 %v252, %v269
    %v283 = vmul.f32 %v256, %v269
    %v284 = vmul.f32 %v260, %v269
    %v285 = vmul.f32 %v264, %v269
    %v286 = vadd.f32 %v186, %v270
    %v287 = vadd.f32 %v187, %v271
    %v288 = vadd.f32 %v188, %v272
    %v289 = vadd.f32 %v189, %v273
    %v290 = vadd.f32 %v190, %v274
    %v291 = vadd.f32 %v191, %v275
    %v292 = vadd.f32 %v192, %v276
    %v293 = vadd.f32 %v193, %v277
    %v294 = vadd.f32 %v194, %v278
    %v295 = vadd.f32 %v195, %v279
    %v296 = vadd.f32 %v196, %v280
    %v297 = vadd.f32 %v197, %v281
    %v298 = vadd.f32 %v198, %v282
    %v299 = vadd.f32 %v199, %v283
    %v300 = vadd.f32 %v200, %v284
    %v301 = vadd.f32 %v201, %v285
    %302 = vset.pattern.permute.xlu0 2
    %303 = vperm.xlu0 %302, %v85
    %v304 = vpop.permute.xlu0 %303
    %306 = vset.pattern.permute.xlu0 2
    %307 = vperm.xlu0 %306, %v86
    %v308 = vpop.permute.xlu0 %307
    %310 = vset.pattern.permute.xlu0 2
    %311 = vperm.xlu0 %310, %v87
    %v312 = vpop.permute.xlu0 %311
    %314 = vset.pattern.permute.xlu0 2
    %315 = vperm.xlu0 %314, %v88
    %v316 = vpop.permute.xlu0 %315
    %318 = vset.pattern.permute.xlu0 2
    %319 = vperm.xlu0 %318, %v89
    %v320 = vpop.permute.xlu0 %319
    %322 = vset.pattern.permute.xlu0 2
    %323 = vperm.xlu0 %322, %v90
    %v324 = vpop.permute.xlu0 %323
    %326 = vset.pattern.permute.xlu0 2
    %327 = vperm.xlu0 %326, %v91
    %v328 = vpop.permute.xlu0 %327
    %330 = vset.pattern.permute.xlu0 2
    %331 = vperm.xlu0 %330, %v92
    %v332 = vpop.permute.xlu0 %331
    %334 = vset.pattern.permute.xlu0 2
    %335 = vperm.xlu0 %334, %v93
    %v336 = vpop.permute.xlu0 %335
    %338 = vset.pattern.permute.xlu0 2
    %339 = vperm.xlu0 %338, %v94
    %v340 = vpop.permute.xlu0 %339
    %342 = vset.pattern.permute.xlu0 2
    %343 = vperm.xlu0 %342, %v95
    %v344 = vpop.permute.xlu0 %343
    %346 = vset.pattern.permute.xlu0 2
    %347 = vperm.xlu0 %346, %v96
    %v348 = vpop.permute.xlu0 %347
    %350 = vset.pattern.permute.xlu0 2
    %351 = vperm.xlu0 %350, %v97
    %v352 = vpop.permute.xlu0 %351
    %354 = vset.pattern.permute.xlu0 2
    %355 = vperm.xlu0 %354, %v98
    %v356 = vpop.permute.xlu0 %355
    %358 = vset.pattern.permute.xlu0 2
    %359 = vperm.xlu0 %358, %v99
    %v360 = vpop.permute.xlu0 %359
    %362 = vset.pattern.permute.xlu0 2
    %363 = vperm.xlu0 %362, %v100
    %v364 = vpop.permute.xlu0 %363
    %v366 = vlaneseq
    %v367 = vshrl.u32 %v366, 7
    %v368 = vsub.s32 2, %v367
    %v369 = vrot.slane %v101, %v368
    %v370 = vmul.f32 %v304, %v369
    %v371 = vmul.f32 %v308, %v369
    %v372 = vmul.f32 %v312, %v369
    %v373 = vmul.f32 %v316, %v369
    %v374 = vmul.f32 %v320, %v369
    %v375 = vmul.f32 %v324, %v369
    %v376 = vmul.f32 %v328, %v369
    %v377 = vmul.f32 %v332, %v369
    %v378 = vmul.f32 %v336, %v369
    %v379 = vmul.f32 %v340, %v369
    %v380 = vmul.f32 %v344, %v369
    %v381 = vmul.f32 %v348, %v369
    %v382 = vmul.f32 %v352, %v369
    %v383 = vmul.f32 %v356, %v369
    %v384 = vmul.f32 %v360, %v369
    %v385 = vmul.f32 %v364, %v369
    %v386 = vadd.f32 %v286, %v370
    %v387 = vadd.f32 %v287, %v371
    %v388 = vadd.f32 %v288, %v372
    %v389 = vadd.f32 %v289, %v373
    %v390 = vadd.f32 %v290, %v374
    %v391 = vadd.f32 %v291, %v375
    %v392 = vadd.f32 %v292, %v376
    %v393 = vadd.f32 %v293, %v377
    %v394 = vadd.f32 %v294, %v378
    %v395 = vadd.f32 %v295, %v379
    %v396 = vadd.f32 %v296, %v380
    %v397 = vadd.f32 %v297, %v381
    %v398 = vadd.f32 %v298, %v382
    %v399 = vadd.f32 %v299, %v383
    %v400 = vadd.f32 %v300, %v384
    %v401 = vadd.f32 %v301, %v385
    %v402 = vld [vmem:[%s3] sm:$0x1]
    %v404 = vlaneseq
    %v405 = vshrl.u32 %v404, 7
    %v406 = vsub.s32 0, %v405
    %v407 = vrot.slane %v402, %v406
    %v409 = vadd.f32 %v386, %v407
    %v410 = vadd.f32 %v387, %v407
    %v411 = vadd.f32 %v388, %v407
    %v412 = vadd.f32 %v389, %v407
    %v413 = vadd.f32 %v390, %v407
    %v414 = vadd.f32 %v391, %v407
    %v415 = vadd.f32 %v392, %v407
    %v416 = vadd.f32 %v393, %v407
    %v417 = vadd.f32 %v394, %v407
    %v418 = vadd.f32 %v395, %v407
    %v419 = vadd.f32 %v396, %v407
    %v420 = vadd.f32 %v397, %v407
    %v421 = vadd.f32 %v398, %v407
    %v422 = vadd.f32 %v399, %v407
    %v423 = vadd.f32 %v400, %v407
    %v424 = vadd.f32 %v401, %v407
    %v425 = vmax.f32 %v409, 0.0
    %v426 = vmax.f32 %v410, 0.0
    %v427 = vmax.f32 %v411, 0.0
    %v428 = vmax.f32 %v412, 0.0
    %v429 = vmax.f32 %v413, 0.0
    %v430 = vmax.f32 %v414, 0.0
    %v431 = vmax.f32 %v415, 0.0
    %v432 = vmax.f32 %v416, 0.0
    %v433 = vmax.f32 %v417, 0.0
    %v434 = vmax.f32 %v418, 0.0
    %v435 = vmax.f32 %v419, 0.0
    %v436 = vmax.f32 %v420, 0.0
    %v437 = vmax.f32 %v421, 0.0
    %v438 = vmax.f32 %v422, 0.0
    %v439 = vmax.f32 %v423, 0.0
    %v440 = vmax.f32 %v424, 0.0
    %v441 = vpack.c.bf16 %v426, %v425
    %v442 = vpack.c.bf16 %v428, %v427
    %v443 = vpack.c.bf16 %v430, %v429
    %v444 = vpack.c.bf16 %v432, %v431
    %v445 = vpack.c.bf16 %v434, %v433
    %v446 = vpack.c.bf16 %v436, %v435
    %v447 = vpack.c.bf16 %v438, %v437
    %v448 = vpack.c.bf16 %v440, %v439
    %v449 = vld [vmem:[%s4] sm:$0xf]
    %v450 = vld [vmem:[%s4 + $0x4] sm:$0xf]
    %v451 = vld [vmem:[%s4 + $0x8] sm:$0xf]
    %v452 = vld [vmem:[%s4 + $0xc] sm:$0xf]
    %v453 = vld [vmem:[%s4 + $0x10] sm:$0xf]
    %v454 = vld [vmem:[%s4 + $0x14] sm:$0xf]
    %v455 = vld [vmem:[%s4 + $0x18] sm:$0xf]
    %v456 = vld [vmem:[%s4 + $0x1c] sm:$0xf]
    %v457 = vld [vmem:[%s4 + $0x20] sm:$0xf]
    %v458 = vld [vmem:[%s4 + $0x24] sm:$0xf]
    %v459 = vld [vmem:[%s4 + $0x28] sm:$0xf]
    %v460 = vld [vmem:[%s4 + $0x2c] sm:$0xf]
    %v461 = vld [vmem:[%s4 + $0x30] sm:$0xf]
    %v462 = vld [vmem:[%s4 + $0x34] sm:$0xf]
    %v463 = vld [vmem:[%s4 + $0x38] sm:$0xf]
    %v464 = vld [vmem:[%s4 + $0x3c] sm:$0xf]
    %v465 = vld [vmem:[%s5] sm:$0x1]
    %v467 = vlaneseq
    %v468 = vshrl.u32 %v467, 7
    %v469 = vsub.s32 0, %v468
    %v470 = vrot.slane %v465, %v469
    %v488 = vunpack.c.l.b16 %v449
    %v489 = vunpack.c.l.b16 %v450
    %v490 = vunpack.c.l.b16 %v451
    %v491 = vunpack.c.l.b16 %v452
    %v492 = vunpack.c.l.b16 %v453
    %v493 = vunpack.c.l.b16 %v454
    %v494 = vunpack.c.l.b16 %v455
    %v495 = vunpack.c.l.b16 %v456
    %v496 = vunpack.c.l.b16 %v457
    %v497 = vunpack.c.l.b16 %v458
    %v498 = vunpack.c.l.b16 %v459
    %v499 = vunpack.c.l.b16 %v460
    %v500 = vunpack.c.l.b16 %v461
    %v501 = vunpack.c.l.b16 %v462
    %v502 = vunpack.c.l.b16 %v463
    %v503 = vunpack.c.l.b16 %v464
    %v504 = vpack.c.b16 %v489, %v488
    %v505 = vpack.c.b16 %v491, %v490
    %v506 = vpack.c.b16 %v493, %v492
    %v507 = vpack.c.b16 %v495, %v494
    %v508 = vpack.c.b16 %v497, %v496
    %v509 = vpack.c.b16 %v499, %v498
    %v510 = vpack.c.b16 %v501, %v500
    %v511 = vpack.c.b16 %v503, %v502
    %520 = vmatprep.subr.bf16.mxu0 0
    %521 = vmatpush1.bf16.msra.mxu0 %v511
    %522 = vmatprep.subr.bf16.mxu0 0
    %523 = vmatpush1.bf16.msra.mxu0 %v510
    %524 = vmatprep.subr.bf16.mxu0 0
    %525 = vmatpush1.bf16.msra.mxu0 %v509
    %526 = vmatprep.subr.bf16.mxu0 0
    %527 = vmatpush1.bf16.msra.mxu0 %v508
    %528 = vmatprep.subr.bf16.mxu0 0
    %529 = vmatpush1.bf16.msra.mxu0 %v507
    %530 = vmatprep.subr.bf16.mxu0 0
    %531 = vmatpush1.bf16.msra.mxu0 %v506
    %532 = vmatprep.subr.bf16.mxu0 0
    %533 = vmatpush1.bf16.msra.mxu0 %v505
    %534 = vmatprep.subr.bf16.mxu0 0
    %535 = vmatpush1.bf16.msra.mxu0 %v504
    %536 = vmatprep.subr.bf16.mxu0 0
    %537 = vmatpush2.bf16.msra.mxu0 0
    %538 = vmatprep.subr.bf16.mxu0 0
    %539 = vmatpush2.bf16.msra.mxu0 0
    %540 = vmatprep.subr.bf16.mxu0 0
    %541 = vmatpush2.bf16.msra.mxu0 0
    %542 = vmatprep.subr.bf16.mxu0 0
    %543 = vmatpush2.bf16.msra.mxu0 0
    %544 = vmatprep.subr.bf16.mxu0 0
    %545 = vmatpush2.bf16.msra.mxu0 0
    %546 = vmatprep.subr.bf16.mxu0 0
    %547 = vmatpush2.bf16.msra.mxu0 0
    %548 = vmatprep.subr.bf16.mxu0 0
    %549 = vmatpush2.bf16.msra.mxu0 0
    %550 = vmatprep.subr.bf16.mxu0 0
    %551 = vmatpush2.bf16.msra.mxu0 0
    %552 = vmatprep.mubr.bf16.mxu0 0
    %553 = vmatmul.mubr.bf16.gmra.mxu0 %v441
    %v554 = vpop.f32.mrf.mxu0
    %v555 = vadd.f32 %v470, %v554
    %v556 = vpop.f32.mrf.mxu0
    %v557 = vpop.f32.mrf.mxu0
    %v558 = vadd.f32 %v470, %v557
    %v559 = vpop.f32.mrf.mxu0
    %560 = vmatprep.mubr.bf16.mxu0 0
    %561 = vmatmul.mubr.bf16.gmra.mxu0 %v442
    %v562 = vpop.f32.mrf.mxu0
    %v563 = vadd.f32 %v470, %v562
    %v564 = vpop.f32.mrf.mxu0
    %v565 = vpop.f32.mrf.mxu0
    %v566 = vadd.f32 %v470, %v565
    %v567 = vpop.f32.mrf.mxu0
    %568 = vmatprep.mubr.bf16.mxu0 0
    %569 = vmatmul.mubr.bf16.gmra.mxu0 %v443
    %v570 = vpop.f32.mrf.mxu0
    %v571 = vadd.f32 %v470, %v570
    %v572 = vpop.f32.mrf.mxu0
    %v573 = vpop.f32.mrf.mxu0
    %v574 = vadd.f32 %v470, %v573
    %v575 = vpop.f32.mrf.mxu0
    %576 = vmatprep.mubr.bf16.mxu0 0
    %577 = vmatmul.mubr.bf16.gmra.mxu0 %v444
    %v578 = vpop.f32.mrf.mxu0
    %v579 = vadd.f32 %v470, %v578
    %v580 = vpop.f32.mrf.mxu0
    %v581 = vpop.f32.mrf.mxu0
    %v582 = vadd.f32 %v470, %v581
    %v583 = vpop.f32.mrf.mxu0
    %584 = vmatprep.mubr.bf16.mxu0 0
    %585 = vmatmul.mubr.bf16.gmra.mxu0 %v445
    %v586 = vpop.f32.mrf.mxu0
    %v587 = vadd.f32 %v470, %v586
    %v588 = vpop.f32.mrf.mxu0
    %v589 = vpop.f32.mrf.mxu0
    %v590 = vadd.f32 %v470, %v589
    %v591 = vpop.f32.mrf.mxu0
    %592 = vmatprep.mubr.bf16.mxu0 0
    %593 = vmatmul.mubr.bf16.gmra.mxu0 %v446
    %v594 = vpop.f32.mrf.mxu0
    %v595 = vadd.f32 %v470, %v594
    %v596 = vpop.f32.mrf.mxu0
    %v597 = vpop.f32.mrf.mxu0
    %v598 = vadd.f32 %v470, %v597
    %v599 = vpop.f32.mrf.mxu0
    %600 = vmatprep.mubr.bf16.mxu0 0
    %601 = vmatmul.mubr.bf16.gmra.mxu0 %v447
    %v602 = vpop.f32.mrf.mxu0
    %v603 = vadd.f32 %v470, %v602
    %v604 = vpop.f32.mrf.mxu0
    %v605 = vpop.f32.mrf.mxu0
    %v606 = vadd.f32 %v470, %v605
    %v607 = vpop.f32.mrf.mxu0
    %608 = vmatprep.mubr.bf16.mxu0 0
    %609 = vmatmul.mubr.bf16.gmra.mxu0 %v448
    %v610 = vpop.f32.mrf.mxu0
    %v611 = vadd.f32 %v470, %v610
    %v612 = vpop.f32.mrf.mxu0
    %v613 = vpop.f32.mrf.mxu0
    %v614 = vadd.f32 %v470, %v613
    %v615 = vpop.f32.mrf.mxu0
    %616 = vdwg.mxu0
    %v617 = vmax.f32 %v555, 0.0
    %v618 = vmax.f32 %v558, 0.0
    %v619 = vmax.f32 %v563, 0.0
    %v620 = vmax.f32 %v566, 0.0
    %v621 = vmax.f32 %v571, 0.0
    %v622 = vmax.f32 %v574, 0.0
    %v623 = vmax.f32 %v579, 0.0
    %v624 = vmax.f32 %v582, 0.0
    %v625 = vmax.f32 %v587, 0.0
    %v626 = vmax.f32 %v590, 0.0
    %v627 = vmax.f32 %v595, 0.0
    %v628 = vmax.f32 %v598, 0.0
    %v629 = vmax.f32 %v603, 0.0
    %v630 = vmax.f32 %v606, 0.0
    %v631 = vmax.f32 %v611, 0.0
    %v632 = vmax.f32 %v614, 0.0
    %v633 = vpack.c.bf16 %v618, %v617
    %v634 = vpack.c.bf16 %v620, %v619
    %v635 = vpack.c.bf16 %v622, %v621
    %v636 = vpack.c.bf16 %v624, %v623
    %v637 = vpack.c.bf16 %v626, %v625
    %v638 = vpack.c.bf16 %v628, %v627
    %v639 = vpack.c.bf16 %v630, %v629
    %v640 = vpack.c.bf16 %v632, %v631
    %v641 = vld [vmem:[%s6] sm:$0xff]
    %v642 = vld [vmem:[%s6 + $0x8] sm:$0xff]
    %v643 = vld [vmem:[%s6 + $0x10] sm:$0xff]
    %v644 = vld [vmem:[%s6 + $0x18] sm:$0xff]
    %v645 = vld [vmem:[%s6 + $0x20] sm:$0xff]
    %v646 = vld [vmem:[%s6 + $0x28] sm:$0xff]
    %v647 = vld [vmem:[%s6 + $0x30] sm:$0xff]
    %v648 = vld [vmem:[%s6 + $0x38] sm:$0xff]
    %v649 = vld [vmem:[%s6 + $0x40] sm:$0xff]
    %v650 = vld [vmem:[%s6 + $0x48] sm:$0xff]
    %v651 = vld [vmem:[%s6 + $0x50] sm:$0xff]
    %v652 = vld [vmem:[%s6 + $0x58] sm:$0xff]
    %v653 = vld [vmem:[%s6 + $0x60] sm:$0xff]
    %v654 = vld [vmem:[%s6 + $0x68] sm:$0xff]
    %v655 = vld [vmem:[%s6 + $0x70] sm:$0xff]
    %v656 = vld [vmem:[%s6 + $0x78] sm:$0xff]
    %v657 = vld [vmem:[%s7] sm:$0x3]
    %v659 = vlaneseq
    %v660 = vshrl.u32 %v659, 7
    %v661 = vsub.s32 0, %v660
    %v662 = vrot.slane %v657, %v661
    %v663 = vlaneseq
    %v664 = vshrl.u32 %v663, 7
    %v665 = vsub.s32 1, %v664
    %v666 = vrot.slane %v657, %v665
    %v685 = vunpack.c.l.b16 %v641
    %v686 = vunpack.c.h.b16 %v641
    %v687 = vunpack.c.l.b16 %v642
    %v688 = vunpack.c.h.b16 %v642
    %v689 = vunpack.c.l.b16 %v643
    %v690 = vunpack.c.h.b16 %v643
    %v691 = vunpack.c.l.b16 %v644
    %v692 = vunpack.c.h.b16 %v644
    %v693 = vunpack.c.l.b16 %v645
    %v694 = vunpack.c.h.b16 %v645
    %v695 = vunpack.c.l.b16 %v646
    %v696 = vunpack.c.h.b16 %v646
    %v697 = vunpack.c.l.b16 %v647
    %v698 = vunpack.c.h.b16 %v647
    %v699 = vunpack.c.l.b16 %v648
    %v700 = vunpack.c.h.b16 %v648
    %v701 = vunpack.c.l.b16 %v649
    %v702 = vunpack.c.h.b16 %v649
    %v703 = vunpack.c.l.b16 %v650
    %v704 = vunpack.c.h.b16 %v650
    %v705 = vunpack.c.l.b16 %v651
    %v706 = vunpack.c.h.b16 %v651
    %v707 = vunpack.c.l.b16 %v652
    %v708 = vunpack.c.h.b16 %v652
    %v709 = vunpack.c.l.b16 %v653
    %v710 = vunpack.c.h.b16 %v653
    %v711 = vunpack.c.l.b16 %v654
    %v712 = vunpack.c.h.b16 %v654
    %v713 = vunpack.c.l.b16 %v655
    %v714 = vunpack.c.h.b16 %v655
    %v715 = vunpack.c.l.b16 %v656
    %v716 = vunpack.c.h.b16 %v656
    %v717 = vpack.c.b16 %v687, %v685
    %v718 = vpack.c.b16 %v688, %v686
    %v719 = vpack.c.b16 %v691, %v689
    %v720 = vpack.c.b16 %v692, %v690
    %v721 = vpack.c.b16 %v695, %v693
    %v722 = vpack.c.b16 %v696, %v694
    %v723 = vpack.c.b16 %v699, %v697
    %v724 = vpack.c.b16 %v700, %v698
    %v725 = vpack.c.b16 %v703, %v701
    %v726 = vpack.c.b16 %v704, %v702
    %v727 = vpack.c.b16 %v707, %v705
    %v728 = vpack.c.b16 %v708, %v706
    %v729 = vpack.c.b16 %v711, %v709
    %v730 = vpack.c.b16 %v712, %v710
    %v731 = vpack.c.b16 %v715, %v713
    %v732 = vpack.c.b16 %v716, %v714
    %749 = vmatprep.subr.bf16.mxu0 %v732
    %750 = vmatpush1.bf16.msra.mxu0 %v731
    %751 = vmatprep.subr.bf16.mxu0 %v730
    %752 = vmatpush1.bf16.msra.mxu0 %v729
    %753 = vmatprep.subr.bf16.mxu0 %v728
    %754 = vmatpush1.bf16.msra.mxu0 %v727
    %755 = vmatprep.subr.bf16.mxu0 %v726
    %756 = vmatpush1.bf16.msra.mxu0 %v725
    %757 = vmatprep.subr.bf16.mxu0 %v724
    %758 = vmatpush1.bf16.msra.mxu0 %v723
    %759 = vmatprep.subr.bf16.mxu0 %v722
    %760 = vmatpush1.bf16.msra.mxu0 %v721
    %761 = vmatprep.subr.bf16.mxu0 %v720
    %762 = vmatpush1.bf16.msra.mxu0 %v719
    %763 = vmatprep.subr.bf16.mxu0 %v718
    %764 = vmatpush1.bf16.msra.mxu0 %v717
    %765 = vmatprep.subr.bf16.mxu0 0
    %766 = vmatpush2.bf16.msra.mxu0 0
    %767 = vmatprep.subr.bf16.mxu0 0
    %768 = vmatpush2.bf16.msra.mxu0 0
    %769 = vmatprep.subr.bf16.mxu0 0
    %770 = vmatpush2.bf16.msra.mxu0 0
    %771 = vmatprep.subr.bf16.mxu0 0
    %772 = vmatpush2.bf16.msra.mxu0 0
    %773 = vmatprep.subr.bf16.mxu0 0
    %774 = vmatpush2.bf16.msra.mxu0 0
    %775 = vmatprep.subr.bf16.mxu0 0
    %776 = vmatpush2.bf16.msra.mxu0 0
    %777 = vmatprep.subr.bf16.mxu0 0
    %778 = vmatpush2.bf16.msra.mxu0 0
    %779 = vmatprep.subr.bf16.mxu0 0
    %780 = vmatpush2.bf16.msra.mxu0 0
    %781 = vmatprep.mubr.bf16.mxu0 0
    %782 = vmatmul.mubr.bf16.gmra.mxu0 %v633
    %v783 = vpop.f32.mrf.mxu0
    %v784 = vadd.f32 %v662, %v783
    %v785 = vpop.f32.mrf.mxu0
    %v786 = vadd.f32 %v666, %v785
    %v787 = vpop.f32.mrf.mxu0
    %v788 = vadd.f32 %v662, %v787
    %v789 = vpop.f32.mrf.mxu0
    %v790 = vadd.f32 %v666, %v789
    %791 = vmatprep.mubr.bf16.mxu0 0
    %792 = vmatmul.mubr.bf16.gmra.mxu0 %v634
    %v793 = vpop.f32.mrf.mxu0
    %v794 = vadd.f32 %v662, %v793
    %v795 = vpop.f32.mrf.mxu0
    %v796 = vadd.f32 %v666, %v795
    %v797 = vpop.f32.mrf.mxu0
    %v798 = vadd.f32 %v662, %v797
    %v799 = vpop.f32.mrf.mxu0
    %v800 = vadd.f32 %v666, %v799
    %801 = vmatprep.mubr.bf16.mxu0 0
    %802 = vmatmul.mubr.bf16.gmra.mxu0 %v635
    %v803 = vpop.f32.mrf.mxu0
    %v804 = vadd.f32 %v662, %v803
    %v805 = vpop.f32.mrf.mxu0
    %v806 = vadd.f32 %v666, %v805
    %v807 = vpop.f32.mrf.mxu0
    %v808 = vadd.f32 %v662, %v807
    %v809 = vpop.f32.mrf.mxu0
    %v810 = vadd.f32 %v666, %v809
    %811 = vmatprep.mubr.bf16.mxu0 0
    %812 = vmatmul.mubr.bf16.gmra.mxu0 %v636
    %v813 = vpop.f32.mrf.mxu0
    %v814 = vadd.f32 %v662, %v813
    %v815 = vpop.f32.mrf.mxu0
    %v816 = vadd.f32 %v666, %v815
    %v817 = vpop.f32.mrf.mxu0
    %v818 = vadd.f32 %v662, %v817
    %v819 = vpop.f32.mrf.mxu0
    %v820 = vadd.f32 %v666, %v819
    %821 = vmatprep.mubr.bf16.mxu0 0
    %822 = vmatmul.mubr.bf16.gmra.mxu0 %v637
    %v823 = vpop.f32.mrf.mxu0
    %v824 = vadd.f32 %v662, %v823
    %v825 = vpop.f32.mrf.mxu0
    %v826 = vadd.f32 %v666, %v825
    %v827 = vpop.f32.mrf.mxu0
    %v828 = vadd.f32 %v662, %v827
    %v829 = vpop.f32.mrf.mxu0
    %v830 = vadd.f32 %v666, %v829
    %831 = vmatprep.mubr.bf16.mxu0 0
    %832 = vmatmul.mubr.bf16.gmra.mxu0 %v638
    %v833 = vpop.f32.mrf.mxu0
    %v834 = vadd.f32 %v662, %v833
    %v835 = vpop.f32.mrf.mxu0
    %v836 = vadd.f32 %v666, %v835
    %v837 = vpop.f32.mrf.mxu0
    %v838 = vadd.f32 %v662, %v837
    %v839 = vpop.f32.mrf.mxu0
    %v840 = vadd.f32 %v666, %v839
    %841 = vmatprep.mubr.bf16.mxu0 0
    %842 = vmatmul.mubr.bf16.gmra.mxu0 %v639
    %v843 = vpop.f32.mrf.mxu0
    %v844 = vadd.f32 %v662, %v843
    %v845 = vpop.f32.mrf.mxu0
    %v846 = vadd.f32 %v666, %v845
    %v847 = vpop.f32.mrf.mxu0
    %v848 = vadd.f32 %v662, %v847
    %v849 = vpop.f32.mrf.mxu0
    %v850 = vadd.f32 %v666, %v849
    %851 = vmatprep.mubr.bf16.mxu0 0
    %852 = vmatmul.mubr.bf16.gmra.mxu0 %v640
    %v853 = vpop.f32.mrf.mxu0
    %v854 = vadd.f32 %v662, %v853
    %v855 = vpop.f32.mrf.mxu0
    %v856 = vadd.f32 %v666, %v855
    %v857 = vpop.f32.mrf.mxu0
    %v858 = vadd.f32 %v662, %v857
    %v859 = vpop.f32.mrf.mxu0
    %v860 = vadd.f32 %v666, %v859
    %861 = vdwg.mxu0
    %v862 = vmax.f32 %v784, %v788
    %v863 = vrot.slane %v862, 4
    %v864 = vmax.f32 %v862, %v863
    %v865 = vrot.slane %v864, 2
    %v866 = vmax.f32 %v864, %v865
    %v867 = vrot.slane %v866, 1
    %v868 = vmax.f32 %v866, %v867
    %v869 = vmax.f32 %v786, %v790
    %v870 = vrot.slane %v869, 4
    %v871 = vmax.f32 %v869, %v870
    %v872 = vrot.slane %v871, 2
    %v873 = vmax.f32 %v871, %v872
    %v874 = vrot.slane %v873, 1
    %v875 = vmax.f32 %v873, %v874
    %v876 = vmax.f32 %v794, %v798
    %v877 = vrot.slane %v876, 4
    %v878 = vmax.f32 %v876, %v877
    %v879 = vrot.slane %v878, 2
    %v880 = vmax.f32 %v878, %v879
    %v881 = vrot.slane %v880, 1
    %v882 = vmax.f32 %v880, %v881
    %v883 = vmax.f32 %v796, %v800
    %v884 = vrot.slane %v883, 4
    %v885 = vmax.f32 %v883, %v884
    %v886 = vrot.slane %v885, 2
    %v887 = vmax.f32 %v885, %v886
    %v888 = vrot.slane %v887, 1
    %v889 = vmax.f32 %v887, %v888
    %v890 = vmax.f32 %v804, %v808
    %v891 = vrot.slane %v890, 4
    %v892 = vmax.f32 %v890, %v891
    %v893 = vrot.slane %v892, 2
    %v894 = vmax.f32 %v892, %v893
    %v895 = vrot.slane %v894, 1
    %v896 = vmax.f32 %v894, %v895
    %v897 = vmax.f32 %v806, %v810
    %v898 = vrot.slane %v897, 4
    %v899 = vmax.f32 %v897, %v898
    %v900 = vrot.slane %v899, 2
    %v901 = vmax.f32 %v899, %v900
    %v902 = vrot.slane %v901, 1
    %v903 = vmax.f32 %v901, %v902
    %v904 = vmax.f32 %v814, %v818
    %v905 = vrot.slane %v904, 4
    %v906 = vmax.f32 %v904, %v905
    %v907 = vrot.slane %v906, 2
    %v908 = vmax.f32 %v906, %v907
    %v909 = vrot.slane %v908, 1
    %v910 = vmax.f32 %v908, %v909
    %v911 = vmax.f32 %v816, %v820
    %v912 = vrot.slane %v911, 4
    %v913 = vmax.f32 %v911, %v912
    %v914 = vrot.slane %v913, 2
    %v915 = vmax.f32 %v913, %v914
    %v916 = vrot.slane %v915, 1
    %v917 = vmax.f32 %v915, %v916
    %v918 = vmax.f32 %v824, %v828
    %v919 = vrot.slane %v918, 4
    %v920 = vmax.f32 %v918, %v919
    %v921 = vrot.slane %v920, 2
    %v922 = vmax.f32 %v920, %v921
    %v923 = vrot.slane %v922, 1
    %v924 = vmax.f32 %v922, %v923
    %v925 = vmax.f32 %v826, %v830
    %v926 = vrot.slane %v925, 4
    %v927 = vmax.f32 %v925, %v926
    %v928 = vrot.slane %v927, 2
    %v929 = vmax.f32 %v927, %v928
    %v930 = vrot.slane %v929, 1
    %v931 = vmax.f32 %v929, %v930
    %v932 = vmax.f32 %v834, %v838
    %v933 = vrot.slane %v932, 4
    %v934 = vmax.f32 %v932, %v933
    %v935 = vrot.slane %v934, 2
    %v936 = vmax.f32 %v934, %v935
    %v937 = vrot.slane %v936, 1
    %v938 = vmax.f32 %v936, %v937
    %v939 = vmax.f32 %v836, %v840
    %v940 = vrot.slane %v939, 4
    %v941 = vmax.f32 %v939, %v940
    %v942 = vrot.slane %v941, 2
    %v943 = vmax.f32 %v941, %v942
    %v944 = vrot.slane %v943, 1
    %v945 = vmax.f32 %v943, %v944
    %v946 = vmax.f32 %v844, %v848
    %v947 = vrot.slane %v946, 4
    %v948 = vmax.f32 %v946, %v947
    %v949 = vrot.slane %v948, 2
    %v950 = vmax.f32 %v948, %v949
    %v951 = vrot.slane %v950, 1
    %v952 = vmax.f32 %v950, %v951
    %v953 = vmax.f32 %v846, %v850
    %v954 = vrot.slane %v953, 4
    %v955 = vmax.f32 %v953, %v954
    %v956 = vrot.slane %v955, 2
    %v957 = vmax.f32 %v955, %v956
    %v958 = vrot.slane %v957, 1
    %v959 = vmax.f32 %v957, %v958
    %v960 = vmax.f32 %v854, %v858
    %v961 = vrot.slane %v960, 4
    %v962 = vmax.f32 %v960, %v961
    %v963 = vrot.slane %v962, 2
    %v964 = vmax.f32 %v962, %v963
    %v965 = vrot.slane %v964, 1
    %v966 = vmax.f32 %v964, %v965
    %v967 = vmax.f32 %v856, %v860
    %v968 = vrot.slane %v967, 4
    %v969 = vmax.f32 %v967, %v968
    %v970 = vrot.slane %v969, 2
    %v971 = vmax.f32 %v969, %v970
    %v972 = vrot.slane %v971, 1
    %v973 = vmax.f32 %v971, %v972
    %v974 = vld [vmem:[#allocation2] sm:$0xff]
    %v975 = vld [vmem:[#allocation2 + $0x8] sm:$0xff]
    %vm992 = vcmask 1041409
    %v993 = vsel %vm992, %v882, %v868
    %vm994 = vcmask 1042434
    %v995 = vsel %vm994, %v896, %v993
    %vm996 = vcmask 1043459
    %v997 = vsel %vm996, %v910, %v995
    %vm998 = vcmask 1044484
    %v999 = vsel %vm998, %v924, %v997
    %vm1000 = vcmask 1045509
    %v1001 = vsel %vm1000, %v938, %v999
    %vm1002 = vcmask 1046534
    %v1003 = vsel %vm1002, %v952, %v1001
    %vm1004 = vcmask 1047559
    %v1005 = vsel %vm1004, %v966, %v1003
    %v1006 = vsel %vm992, %v889, %v875
    %v1007 = vsel %vm994, %v903, %v1006
    %v1008 = vsel %vm996, %v917, %v1007
    %v1009 = vsel %vm998, %v931, %v1008
    %v1010 = vsel %vm1000, %v945, %v1009
    %v1011 = vsel %vm1002, %v959, %v1010
    %v1012 = vsel %vm1004, %v973, %v1011
    %v1015 = vmax.f32 %v974, %v1005
    %v1016 = vmax.f32 %v975, %v1012
    %1017 = vst [vmem:[#allocation2] sm:$0xff] %v1015
    %1018 = vst [vmem:[#allocation2 + $0x8] sm:$0xff] %v1016
    // Predicated region
    $region74: #{tpu_custom_call.1} parent=1 // pred_check
      %p1019 = pneg %p79
    $region75: #{tpu_custom_call.1} parent=1 // pred_check_branch
      %1021 = sbr.rel (%p1019) target = $region77
    $region76: #{tpu_custom_call.1} parent=1 // pred_region
      %v1022 = vld [vmem:[#allocation2] sm:$0xff]
      %v1023 = vld [vmem:[#allocation2 + $0x8] sm:$0xff]
      %v1024 = vmax.f32 %v1022, 0.0
      %v1025 = vmax.f32 %v1023, 0.0
      %v1026 = vpack.c.bf16 %v1024, %v1024
      %v1027 = vpack.c.bf16 %v1025, %v1025
      %v1028 = vld [vmem:[%s1] sm:$0xff]
      %v1029 = vpack.c.bf16 %v1028, %v1028
      %v1030 = vld [vmem:[#allocation3] sm:$0xff]
      %v1031 = vld [vmem:[#allocation3 + $0x8] sm:$0xff]
      %v1032 = vld [vmem:[#allocation3 + $0x10] sm:$0xff]
      %v1033 = vld [vmem:[#allocation3 + $0x18] sm:$0xff]
      %v1034 = vld [vmem:[#allocation3 + $0x20] sm:$0xff]
      %v1035 = vld [vmem:[#allocation3 + $0x28] sm:$0xff]
      %v1036 = vld [vmem:[#allocation3 + $0x30] sm:$0xff]
      %v1037 = vld [vmem:[#allocation3 + $0x38] sm:$0xff]
      %v1038 = vld [vmem:[#allocation3 + $0x40] sm:$0xff]
      %v1039 = vld [vmem:[#allocation3 + $0x48] sm:$0xff]
      %v1040 = vld [vmem:[#allocation3 + $0x50] sm:$0xff]
      %v1041 = vld [vmem:[#allocation3 + $0x58] sm:$0xff]
      %v1042 = vld [vmem:[#allocation3 + $0x60] sm:$0xff]
      %v1043 = vld [vmem:[#allocation3 + $0x68] sm:$0xff]
      %v1044 = vld [vmem:[#allocation3 + $0x70] sm:$0xff]
      %v1045 = vld [vmem:[#allocation3 + $0x78] sm:$0xff]
      %v1046 = vld [vmem:[#allocation3 + $0x80] sm:$0xff]
      %v1047 = vld [vmem:[#allocation3 + $0x88] sm:$0xff]
      %v1048 = vld [vmem:[#allocation3 + $0x90] sm:$0xff]
      %v1049 = vld [vmem:[#allocation3 + $0x98] sm:$0xff]
      %v1050 = vld [vmem:[#allocation3 + $0xa0] sm:$0xff]
      %v1051 = vld [vmem:[#allocation3 + $0xa8] sm:$0xff]
      %v1052 = vld [vmem:[#allocation3 + $0xb0] sm:$0xff]
      %v1053 = vld [vmem:[#allocation3 + $0xb8] sm:$0xff]
      %v1054 = vld [vmem:[#allocation3 + $0xc0] sm:$0xff]
      %v1055 = vld [vmem:[#allocation3 + $0xc8] sm:$0xff]
      %v1056 = vld [vmem:[#allocation3 + $0xd0] sm:$0xff]
      %v1057 = vld [vmem:[#allocation3 + $0xd8] sm:$0xff]
      %v1058 = vld [vmem:[#allocation3 + $0xe0] sm:$0xff]
      %v1059 = vld [vmem:[#allocation3 + $0xe8] sm:$0xff]
      %v1060 = vld [vmem:[#allocation3 + $0xf0] sm:$0xff]
      %v1061 = vld [vmem:[#allocation3 + $0xf8] sm:$0xff]
      %v1062 = vld [vmem:[%s9] sm:$0xf]
      %v1065 = vunpack.c.l.s4 1983009808
      %v1066 = vunpack.c.0.s8 %v1065
      %v1067 = vlaneseq
      %v1068 = vshrl.u32 %v1067, 7
      %v1069 = vsub.s32 %v1066, %v1068
      %v1070 = vrot.slane %v1062, %v1069
      %v1071 = vcombine.high %v1070, %v1070
      %vm1072 = vcmask 23552
      %v1074 = vsel %vm1072, %v1029, 0
      %vm1076 = vcmask 1040384
      %vm1077 = vcmask 1041408
      %v1078 = vsel %vm1076, 4294967295, 65535
      %v1079 = vsel %vm1077, %v1078, 0
      %v1081 = vand.u32 %v1070, %v1079
      %v1084 = vand.u32 %v1071, %v1079
      %1086 = vmatprep.subr.bf16.mxu0 0
      %1087 = vmatpush1.bf16.msra.mxu0 0
      %1088 = vmatprep.subr.bf16.mxu0 0
      %1089 = vmatpush1.bf16.msra.mxu0 0
      %1090 = vmatprep.subr.bf16.mxu0 0
      %1091 = vmatpush1.bf16.msra.mxu0 0
      %1092 = vmatprep.subr.bf16.mxu0 0
      %1093 = vmatpush1.bf16.msra.mxu0 0
      %1094 = vmatprep.subr.bf16.mxu0 0
      %1095 = vmatpush1.bf16.msra.mxu0 0
      %1096 = vmatprep.subr.bf16.mxu0 0
      %1097 = vmatpush1.bf16.msra.mxu0 0
      %1098 = vmatprep.subr.bf16.mxu0 0
      %1099 = vmatpush1.bf16.msra.mxu0 0
      %1100 = vmatprep.subr.bf16.mxu0 %v1084
      %1101 = vmatpush1.bf16.msra.mxu0 %v1081
      %1102 = vmatprep.subr.bf16.mxu0 0
      %1103 = vmatpush2.bf16.msra.mxu0 0
      %1104 = vmatprep.subr.bf16.mxu0 0
      %1105 = vmatpush2.bf16.msra.mxu0 0
      %1106 = vmatprep.subr.bf16.mxu0 0
      %1107 = vmatpush2.bf16.msra.mxu0 0
      %1108 = vmatprep.subr.bf16.mxu0 0
      %1109 = vmatpush2.bf16.msra.mxu0 0
      %1110 = vmatprep.subr.bf16.mxu0 0
      %1111 = vmatpush2.bf16.msra.mxu0 0
      %1112 = vmatprep.subr.bf16.mxu0 0
      %1113 = vmatpush2.bf16.msra.mxu0 0
      %1114 = vmatprep.subr.bf16.mxu0 0
      %1115 = vmatpush2.bf16.msra.mxu0 0
      %1116 = vmatprep.subr.bf16.mxu0 0
      %1117 = vmatpush2.bf16.msra.mxu0 0
      %1118 = vmatprep.mubr.bf16.mxu0 0
      %1119 = vmatmul.mubr.bf16.gmra.mxu0 %v1074
      %v1120 = vpop.f32.mrf.mxu0
      %v1121 = vadd.f32 0.0, %v1120
      %v1122 = vpop.f32.mrf.mxu0
      %v1123 = vadd.f32 0.0, %v1122
      %v1124 = vpop.f32.mrf.mxu0
      %v1125 = vpop.f32.mrf.mxu0
      %1126 = vdwg.mxu0
      %v1159 = vunpack.c.l.b16 %v1030
      %v1160 = vunpack.c.h.b16 %v1030
      %v1161 = vunpack.c.l.b16 %v1031
      %v1162 = vunpack.c.h.b16 %v1031
      %v1163 = vunpack.c.l.b16 %v1032
      %v1164 = vunpack.c.h.b16 %v1032
      %v1165 = vunpack.c.l.b16 %v1033
      %v1166 = vunpack.c.h.b16 %v1033
      %v1167 = vunpack.c.l.b16 %v1034
      %v1168 = vunpack.c.h.b16 %v1034
      %v1169 = vunpack.c.l.b16 %v1035
      %v1170 = vunpack.c.h.b16 %v1035
      %v1171 = vunpack.c.l.b16 %v1036
      %v1172 = vunpack.c.h.b16 %v1036
      %v1173 = vunpack.c.l.b16 %v1037
      %v1174 = vunpack.c.h.b16 %v1037
      %v1175 = vunpack.c.l.b16 %v1038
      %v1176 = vunpack.c.h.b16 %v1038
      %v1177 = vunpack.c.l.b16 %v1039
      %v1178 = vunpack.c.h.b16 %v1039
      %v1179 = vunpack.c.l.b16 %v1040
      %v1180 = vunpack.c.h.b16 %v1040
      %v1181 = vunpack.c.l.b16 %v1041
      %v1182 = vunpack.c.h.b16 %v1041
      %v1183 = vunpack.c.l.b16 %v1042
      %v1184 = vunpack.c.h.b16 %v1042
      %v1185 = vunpack.c.l.b16 %v1043
      %v1186 = vunpack.c.h.b16 %v1043
      %v1187 = vunpack.c.l.b16 %v1044
      %v1188 = vunpack.c.h.b16 %v1044
      %v1189 = vunpack.c.l.b16 %v1045
      %v1190 = vunpack.c.h.b16 %v1045
      %v1191 = vunpack.c.l.b16 %v1046
      %v1192 = vunpack.c.h.b16 %v1046
      %v1193 = vunpack.c.l.b16 %v1047
      %v1194 = vunpack.c.h.b16 %v1047
      %v1195 = vunpack.c.l.b16 %v1048
      %v1196 = vunpack.c.h.b16 %v1048
      %v1197 = vunpack.c.l.b16 %v1049
      %v1198 = vunpack.c.h.b16 %v1049
      %v1199 = vunpack.c.l.b16 %v1050
      %v1200 = vunpack.c.h.b16 %v1050
      %v1201 = vunpack.c.l.b16 %v1051
      %v1202 = vunpack.c.h.b16 %v1051
      %v1203 = vunpack.c.l.b16 %v1052
      %v1204 = vunpack.c.h.b16 %v1052
      %v1205 = vunpack.c.l.b16 %v1053
      %v1206 = vunpack.c.h.b16 %v1053
      %v1207 = vunpack.c.l.b16 %v1054
      %v1208 = vunpack.c.h.b16 %v1054
      %v1209 = vunpack.c.l.b16 %v1055
      %v1210 = vunpack.c.h.b16 %v1055
      %v1211 = vunpack.c.l.b16 %v1056
      %v1212 = vunpack.c.h.b16 %v1056
      %v1213 = vunpack.c.l.b16 %v1057
      %v1214 = vunpack.c.h.b16 %v1057
      %v1215 = vunpack.c.l.b16 %v1058
      %v1216 = vunpack.c.h.b16 %v1058
      %v1217 = vunpack.c.l.b16 %v1059
      %v1218 = vunpack.c.h.b16 %v1059
      %v1219 = vunpack.c.l.b16 %v1060
      %v1220 = vunpack.c.h.b16 %v1060
      %v1221 = vunpack.c.l.b16 %v1061
      %v1222 = vunpack.c.h.b16 %v1061
      %v1223 = vpack.c.b16 %v1161, %v1159
      %v1224 = vpack.c.b16 %v1162, %v1160
      %v1225 = vpack.c.b16 %v1165, %v1163
      %v1226 = vpack.c.b16 %v1166, %v1164
      %v1227 = vpack.c.b16 %v1169, %v1167
      %v1228 = vpack.c.b16 %v1170, %v1168
      %v1229 = vpack.c.b16 %v1173, %v1171
      %v1230 = vpack.c.b16 %v1174, %v1172
      %v1231 = vpack.c.b16 %v1177, %v1175
      %v1232 = vpack.c.b16 %v1178, %v1176
      %v1233 = vpack.c.b16 %v1181, %v1179
      %v1234 = vpack.c.b16 %v1182, %v1180
      %v1235 = vpack.c.b16 %v1185, %v1183
      %v1236 = vpack.c.b16 %v1186, %v1184
      %v1237 = vpack.c.b16 %v1189, %v1187
      %v1238 = vpack.c.b16 %v1190, %v1188
      %v1239 = vpack.c.b16 %v1193, %v1191
      %v1240 = vpack.c.b16 %v1194, %v1192
      %v1241 = vpack.c.b16 %v1197, %v1195
      %v1242 = vpack.c.b16 %v1198, %v1196
      %v1243 = vpack.c.b16 %v1201, %v1199
      %v1244 = vpack.c.b16 %v1202, %v1200
      %v1245 = vpack.c.b16 %v1205, %v1203
      %v1246 = vpack.c.b16 %v1206, %v1204
      %v1247 = vpack.c.b16 %v1209, %v1207
      %v1248 = vpack.c.b16 %v1210, %v1208
      %v1249 = vpack.c.b16 %v1213, %v1211
      %v1250 = vpack.c.b16 %v1214, %v1212
      %v1251 = vpack.c.b16 %v1217, %v1215
      %v1252 = vpack.c.b16 %v1218, %v1216
      %v1253 = vpack.c.b16 %v1221, %v1219
      %v1254 = vpack.c.b16 %v1222, %v1220
      %1287 = vmatprep.subr.bf16.mxu0 %v1238
      %1288 = vmatpush1.bf16.msra.mxu0 %v1237
      %1289 = vmatprep.subr.bf16.mxu0 %v1236
      %1290 = vmatpush1.bf16.msra.mxu0 %v1235
      %1291 = vmatprep.subr.bf16.mxu0 %v1234
      %1292 = vmatpush1.bf16.msra.mxu0 %v1233
      %1293 = vmatprep.subr.bf16.mxu0 %v1232
      %1294 = vmatpush1.bf16.msra.mxu0 %v1231
      %1295 = vmatprep.subr.bf16.mxu0 %v1230
      %1296 = vmatpush1.bf16.msra.mxu0 %v1229
      %1297 = vmatprep.subr.bf16.mxu0 %v1228
      %1298 = vmatpush1.bf16.msra.mxu0 %v1227
      %1299 = vmatprep.subr.bf16.mxu0 %v1226
      %1300 = vmatpush1.bf16.msra.mxu0 %v1225
      %1301 = vmatprep.subr.bf16.mxu0 %v1224
      %1302 = vmatpush1.bf16.msra.mxu0 %v1223
      %1303 = vmatprep.subr.bf16.mxu0 %v1254
      %1304 = vmatpush2.bf16.msra.mxu0 %v1253
      %1305 = vmatprep.subr.bf16.mxu0 %v1252
      %1306 = vmatpush2.bf16.msra.mxu0 %v1251
      %1307 = vmatprep.subr.bf16.mxu0 %v1250
      %1308 = vmatpush2.bf16.msra.mxu0 %v1249
      %1309 = vmatprep.subr.bf16.mxu0 %v1248
      %1310 = vmatpush2.bf16.msra.mxu0 %v1247
      %1311 = vmatprep.subr.bf16.mxu0 %v1246
      %1312 = vmatpush2.bf16.msra.mxu0 %v1245
      %1313 = vmatprep.subr.bf16.mxu0 %v1244
      %1314 = vmatpush2.bf16.msra.mxu0 %v1243
      %1315 = vmatprep.subr.bf16.mxu0 %v1242
      %1316 = vmatpush2.bf16.msra.mxu0 %v1241
      %1317 = vmatprep.subr.bf16.mxu0 %v1240
      %1318 = vmatpush2.bf16.msra.mxu0 %v1239
      %1319 = vmatprep.mubr.bf16.mxu0 %v1027
      %1320 = vmatmul.mubr.bf16.gmra.mxu0 %v1026
      %v1321 = vpop.f32.mrf.mxu0
      %v1322 = vadd.f32 %v1121, %v1321
      %v1323 = vpop.f32.mrf.mxu0
      %v1324 = vadd.f32 %v1123, %v1323
      %v1325 = vpop.f32.mrf.mxu0
      %v1326 = vpop.f32.mrf.mxu0
      %1327 = vdwg.mxu0
      %v1328 = vld [vmem:[%s10] sm:$0x3]
      %v1330 = vlaneseq
      %v1331 = vshrl.u32 %v1330, 7
      %v1332 = vsub.s32 0, %v1331
      %v1333 = vrot.slane %v1328, %v1332
      %v1334 = vlaneseq
      %v1335 = vshrl.u32 %v1334, 7
      %v1336 = vsub.s32 1, %v1335
      %v1337 = vrot.slane %v1328, %v1336
      %v1340 = vadd.f32 %v1322, %v1333
      %v1341 = vadd.f32 %v1324, %v1337
      %v1342 = vmax.f32 %v1340, 0.0
      %v1343 = vmax.f32 %v1341, 0.0
      %v1344 = vpack.c.bf16 %v1342, %v1342
      %v1345 = vpack.c.bf16 %v1343, %v1343
      %v1346 = vld [vmem:[#allocation5] sm:$0xf]
      %v1347 = vld [vmem:[#allocation5 + $0x4] sm:$0xf]
      %v1348 = vld [vmem:[#allocation5 + $0x8] sm:$0xf]
      %v1349 = vld [vmem:[#allocation5 + $0xc] sm:$0xf]
      %v1350 = vld [vmem:[#allocation5 + $0x10] sm:$0xf]
      %v1351 = vld [vmem:[#allocation5 + $0x14] sm:$0xf]
      %v1352 = vld [vmem:[#allocation5 + $0x18] sm:$0xf]
      %v1353 = vld [vmem:[#allocation5 + $0x1c] sm:$0xf]
      %v1354 = vld [vmem:[#allocation5 + $0x20] sm:$0xf]
      %v1355 = vld [vmem:[#allocation5 + $0x24] sm:$0xf]
      %v1356 = vld [vmem:[#allocation5 + $0x28] sm:$0xf]
      %v1357 = vld [vmem:[#allocation5 + $0x2c] sm:$0xf]
      %v1358 = vld [vmem:[#allocation5 + $0x30] sm:$0xf]
      %v1359 = vld [vmem:[#allocation5 + $0x34] sm:$0xf]
      %v1360 = vld [vmem:[#allocation5 + $0x38] sm:$0xf]
      %v1361 = vld [vmem:[#allocation5 + $0x3c] sm:$0xf]
      %v1362 = vld [vmem:[#allocation5 + $0x40] sm:$0xf]
      %v1363 = vld [vmem:[#allocation5 + $0x44] sm:$0xf]
      %v1364 = vld [vmem:[#allocation5 + $0x48] sm:$0xf]
      %v1365 = vld [vmem:[#allocation5 + $0x4c] sm:$0xf]
      %v1366 = vld [vmem:[#allocation5 + $0x50] sm:$0xf]
      %v1367 = vld [vmem:[#allocation5 + $0x54] sm:$0xf]
      %v1368 = vld [vmem:[#allocation5 + $0x58] sm:$0xf]
      %v1369 = vld [vmem:[#allocation5 + $0x5c] sm:$0xf]
      %v1370 = vld [vmem:[#allocation5 + $0x60] sm:$0xf]
      %v1371 = vld [vmem:[#allocation5 + $0x64] sm:$0xf]
      %v1372 = vld [vmem:[#allocation5 + $0x68] sm:$0xf]
      %v1373 = vld [vmem:[#allocation5 + $0x6c] sm:$0xf]
      %v1374 = vld [vmem:[#allocation5 + $0x70] sm:$0xf]
      %v1375 = vld [vmem:[#allocation5 + $0x74] sm:$0xf]
      %v1376 = vld [vmem:[#allocation5 + $0x78] sm:$0xf]
      %v1377 = vld [vmem:[#allocation5 + $0x7c] sm:$0xf]
      %v1378 = vld [vmem:[%s12] sm:$0x1]
      %v1380 = vlaneseq
      %v1381 = vshrl.u32 %v1380, 7
      %v1382 = vsub.s32 0, %v1381
      %v1383 = vrot.slane %v1378, %v1382
      %v1417 = vunpack.c.l.b16 %v1346
      %v1418 = vunpack.c.l.b16 %v1347
      %v1419 = vunpack.c.l.b16 %v1348
      %v1420 = vunpack.c.l.b16 %v1349
      %v1421 = vunpack.c.l.b16 %v1350
      %v1422 = vunpack.c.l.b16 %v1351
      %v1423 = vunpack.c.l.b16 %v1352
      %v1424 = vunpack.c.l.b16 %v1353
      %v1425 = vunpack.c.l.b16 %v1354
      %v1426 = vunpack.c.l.b16 %v1355
      %v1427 = vunpack.c.l.b16 %v1356
      %v1428 = vunpack.c.l.b16 %v1357
      %v1429 = vunpack.c.l.b16 %v1358
      %v1430 = vunpack.c.l.b16 %v1359
      %v1431 = vunpack.c.l.b16 %v1360
      %v1432 = vunpack.c.l.b16 %v1361
      %v1433 = vunpack.c.l.b16 %v1362
      %v1434 = vunpack.c.l.b16 %v1363
      %v1435 = vunpack.c.l.b16 %v1364
      %v1436 = vunpack.c.l.b16 %v1365
      %v1437 = vunpack.c.l.b16 %v1366
      %v1438 = vunpack.c.l.b16 %v1367
      %v1439 = vunpack.c.l.b16 %v1368
      %v1440 = vunpack.c.l.b16 %v1369
      %v1441 = vunpack.c.l.b16 %v1370
      %v1442 = vunpack.c.l.b16 %v1371
      %v1443 = vunpack.c.l.b16 %v1372
      %v1444 = vunpack.c.l.b16 %v1373
      %v1445 = vunpack.c.l.b16 %v1374
      %v1446 = vunpack.c.l.b16 %v1375
      %v1447 = vunpack.c.l.b16 %v1376
      %v1448 = vunpack.c.l.b16 %v1377
      %v1449 = vpack.c.b16 %v1418, %v1417
      %v1450 = vpack.c.b16 %v1420, %v1419
      %v1451 = vpack.c.b16 %v1422, %v1421
      %v1452 = vpack.c.b16 %v1424, %v1423
      %v1453 = vpack.c.b16 %v1426, %v1425
      %v1454 = vpack.c.b16 %v1428, %v1427
      %v1455 = vpack.c.b16 %v1430, %v1429
      %v1456 = vpack.c.b16 %v1432, %v1431
      %v1457 = vpack.c.b16 %v1434, %v1433
      %v1458 = vpack.c.b16 %v1436, %v1435
      %v1459 = vpack.c.b16 %v1438, %v1437
      %v1460 = vpack.c.b16 %v1440, %v1439
      %v1461 = vpack.c.b16 %v1442, %v1441
      %v1462 = vpack.c.b16 %v1444, %v1443
      %v1463 = vpack.c.b16 %v1446, %v1445
      %v1464 = vpack.c.b16 %v1448, %v1447
      %1481 = vmatprep.subr.bf16.mxu0 0
      %1482 = vmatpush1.bf16.msra.mxu0 %v1456
      %1483 = vmatprep.subr.bf16.mxu0 0
      %1484 = vmatpush1.bf16.msra.mxu0 %v1455
      %1485 = vmatprep.subr.bf16.mxu0 0
      %1486 = vmatpush1.bf16.msra.mxu0 %v1454
      %1487 = vmatprep.subr.bf16.mxu0 0
      %1488 = vmatpush1.bf16.msra.mxu0 %v1453
      %1489 = vmatprep.subr.bf16.mxu0 0
      %1490 = vmatpush1.bf16.msra.mxu0 %v1452
      %1491 = vmatprep.subr.bf16.mxu0 0
      %1492 = vmatpush1.bf16.msra.mxu0 %v1451
      %1493 = vmatprep.subr.bf16.mxu0 0
      %1494 = vmatpush1.bf16.msra.mxu0 %v1450
      %1495 = vmatprep.subr.bf16.mxu0 0
      %1496 = vmatpush1.bf16.msra.mxu0 %v1449
      %1497 = vmatprep.subr.bf16.mxu0 0
      %1498 = vmatpush2.bf16.msra.mxu0 %v1464
      %1499 = vmatprep.subr.bf16.mxu0 0
      %1500 = vmatpush2.bf16.msra.mxu0 %v1463
      %1501 = vmatprep.subr.bf16.mxu0 0
      %1502 = vmatpush2.bf16.msra.mxu0 %v1462
      %1503 = vmatprep.subr.bf16.mxu0 0
      %1504 = vmatpush2.bf16.msra.mxu0 %v1461
      %1505 = vmatprep.subr.bf16.mxu0 0
      %1506 = vmatpush2.bf16.msra.mxu0 %v1460
      %1507 = vmatprep.subr.bf16.mxu0 0
      %1508 = vmatpush2.bf16.msra.mxu0 %v1459
      %1509 = vmatprep.subr.bf16.mxu0 0
      %1510 = vmatpush2.bf16.msra.mxu0 %v1458
      %1511 = vmatprep.subr.bf16.mxu0 0
      %1512 = vmatpush2.bf16.msra.mxu0 %v1457
      %1513 = vmatprep.mubr.bf16.mxu0 %v1345
      %1514 = vmatmul.mubr.bf16.gmra.mxu0 %v1344
      %v1515 = vpop.f32.mrf.mxu0
      %v1516 = vadd.f32 %v1383, %v1515
      %v1517 = vpop.f32.mrf.mxu0
      %v1518 = vpop.f32.mrf.mxu0
      %v1519 = vpop.f32.mrf.mxu0
      %1520 = vdwg.mxu0
      %v1521 = vmax.f32 %v1516, 0.0
      %v1522 = vpack.c.bf16 %v1521, %v1521
      %v1523 = vld [vmem:[%s13] sm:$0xf]
      %v1524 = vld [vmem:[%s13 + $0x4] sm:$0xf]
      %v1525 = vld [vmem:[%s13 + $0x8] sm:$0xf]
      %v1526 = vld [vmem:[%s13 + $0xc] sm:$0xf]
      %v1527 = vld [vmem:[%s13 + $0x10] sm:$0xf]
      %v1528 = vld [vmem:[%s13 + $0x14] sm:$0xf]
      %v1529 = vld [vmem:[%s13 + $0x18] sm:$0xf]
      %v1530 = vld [vmem:[%s13 + $0x1c] sm:$0xf]
      %v1531 = vld [vmem:[%s13 + $0x20] sm:$0xf]
      %v1532 = vld [vmem:[%s13 + $0x24] sm:$0xf]
      %v1533 = vld [vmem:[%s13 + $0x28] sm:$0xf]
      %v1534 = vld [vmem:[%s13 + $0x2c] sm:$0xf]
      %v1535 = vld [vmem:[%s13 + $0x30] sm:$0xf]
      %v1536 = vld [vmem:[%s13 + $0x34] sm:$0xf]
      %v1537 = vld [vmem:[%s13 + $0x38] sm:$0xf]
      %v1538 = vld [vmem:[%s13 + $0x3c] sm:$0xf]
      %v1539 = vld [vmem:[%s14] sm:$0x1]
      %v1541 = vlaneseq
      %v1542 = vshrl.u32 %v1541, 7
      %v1543 = vsub.s32 0, %v1542
      %v1544 = vrot.slane %v1539, %v1543
      %v1562 = vunpack.c.l.b16 %v1523
      %v1563 = vunpack.c.l.b16 %v1524
      %v1564 = vunpack.c.l.b16 %v1525
      %v1565 = vunpack.c.l.b16 %v1526
      %v1566 = vunpack.c.l.b16 %v1527
      %v1567 = vunpack.c.l.b16 %v1528
      %v1568 = vunpack.c.l.b16 %v1529
      %v1569 = vunpack.c.l.b16 %v1530
      %v1570 = vunpack.c.l.b16 %v1531
      %v1571 = vunpack.c.l.b16 %v1532
      %v1572 = vunpack.c.l.b16 %v1533
      %v1573 = vunpack.c.l.b16 %v1534
      %v1574 = vunpack.c.l.b16 %v1535
      %v1575 = vunpack.c.l.b16 %v1536
      %v1576 = vunpack.c.l.b16 %v1537
      %v1577 = vunpack.c.l.b16 %v1538
      %v1578 = vpack.c.b16 %v1563, %v1562
      %v1579 = vpack.c.b16 %v1565, %v1564
      %v1580 = vpack.c.b16 %v1567, %v1566
      %v1581 = vpack.c.b16 %v1569, %v1568
      %v1582 = vpack.c.b16 %v1571, %v1570
      %v1583 = vpack.c.b16 %v1573, %v1572
      %v1584 = vpack.c.b16 %v1575, %v1574
      %v1585 = vpack.c.b16 %v1577, %v1576
      %1594 = vmatprep.subr.bf16.mxu0 0
      %1595 = vmatpush1.bf16.msra.mxu0 %v1585
      %1596 = vmatprep.subr.bf16.mxu0 0
      %1597 = vmatpush1.bf16.msra.mxu0 %v1584
      %1598 = vmatprep.subr.bf16.mxu0 0
      %1599 = vmatpush1.bf16.msra.mxu0 %v1583
      %1600 = vmatprep.subr.bf16.mxu0 0
      %1601 = vmatpush1.bf16.msra.mxu0 %v1582
      %1602 = vmatprep.subr.bf16.mxu0 0
      %1603 = vmatpush1.bf16.msra.mxu0 %v1581
      %1604 = vmatprep.subr.bf16.mxu0 0
      %1605 = vmatpush1.bf16.msra.mxu0 %v1580
      %1606 = vmatprep.subr.bf16.mxu0 0
      %1607 = vmatpush1.bf16.msra.mxu0 %v1579
      %1608 = vmatprep.subr.bf16.mxu0 0
      %1609 = vmatpush1.bf16.msra.mxu0 %v1578
      %1610 = vmatprep.subr.bf16.mxu0 0
      %1611 = vmatpush2.bf16.msra.mxu0 0
      %1612 = vmatprep.subr.bf16.mxu0 0
      %1613 = vmatpush2.bf16.msra.mxu0 0
      %1614 = vmatprep.subr.bf16.mxu0 0
      %1615 = vmatpush2.bf16.msra.mxu0 0
      %1616 = vmatprep.subr.bf16.mxu0 0
      %1617 = vmatpush2.bf16.msra.mxu0 0
      %1618 = vmatprep.subr.bf16.mxu0 0
      %1619 = vmatpush2.bf16.msra.mxu0 0
      %1620 = vmatprep.subr.bf16.mxu0 0
      %1621 = vmatpush2.bf16.msra.mxu0 0
      %1622 = vmatprep.subr.bf16.mxu0 0
      %1623 = vmatpush2.bf16.msra.mxu0 0
      %1624 = vmatprep.subr.bf16.mxu0 0
      %1625 = vmatpush2.bf16.msra.mxu0 0
      %1626 = vmatprep.mubr.bf16.mxu0 0
      %1627 = vmatmul.mubr.bf16.gmra.mxu0 %v1522
      %v1628 = vpop.f32.mrf.mxu0
      %v1629 = vadd.f32 %v1544, %v1628
      %v1630 = vpop.f32.mrf.mxu0
      %v1631 = vpop.f32.mrf.mxu0
      %v1632 = vpop.f32.mrf.mxu0
      %1633 = vdwg.mxu0
      %1634 = vst.msk [vmem:[%s15] sm:$0xff] %vm1072, %v1629
    $region77: #{tpu_custom_call.1} parent=1 // pred_fallthru
      _
    // Predicated region
    $region78: #{tpu_custom_call.1} parent=1 // pred_check
      _
    $region79: #{tpu_custom_call.1} parent=1 // pred_check_branch
      %1636 = sbr.rel (0) target = $region81
    $region80: #{tpu_custom_call.1} parent=1 // pred_region
      _
    $region81: #{tpu_custom_call.1} parent=1 // pred_fallthru
      _
    // Predicated region
    $region82: #{tpu_custom_call.1} parent=1 // pred_check
      _
    $region83: #{tpu_custom_call.1} parent=1 // pred_check_branch
      %1638 = sbr.rel (0) target = $region85
    $region84: #{tpu_custom_call.1} parent=1 // pred_region
      _
    $region85: #{tpu_custom_call.1} parent=1 // pred_fallthru
      _
    %1639 = vsyncpa [#allocation4], 1
    %1640 = vsyncpa [#allocation6], 1

</llo_original>
